<compile_context>
chip_gen: v6e
topology: v6e:2x2x1
jax: 0.10.0
libtpu: 0.0.40
codegen_flags: <defaults>
</compile_context>

<pallas_src>
import functools
import math

import jax
import jax.numpy as jnp
from jax.experimental import pallas as pl
from jax.experimental.pallas import tpu as pltpu


def _round_up(x, m):
    return ((x + m - 1) // m) * m


def _vmem_capacity_bytes():
    """Physical VMEM of the current generation; conservative fallback (v7x) if unknown."""
    try:
        info = pltpu.get_tpu_info()
        cap = getattr(info, "vmem_capacity_bytes", None)
        if cap:
            return int(cap)
    except Exception:
        pass
    return 64 * 1024 * 1024


def _largest_hidden_tile(H, th):
    """Largest multiple-of-128 divisor of H that is <= th (bounded VMEM); else H."""
    best = None
    d = 128
    while d <= min(th, H):
        if H % d == 0:
            best = d
        d += 128
    return best if best is not None else H


def _block_mlp_kernel(x_ref, g_ref, be_ref, w1_ref, b1_ref, w2_ref, b2_ref, o_ref,
                      acc_ref, xn_ref, *, use_tanh_gelu, compute_dtype, eps):
    """One (token-tile i, hidden-tile k) step of x + GELU(LN(x)@W1+b1)@W2 + b2.

    x_ref:  (tm, D)      token tile (input dtype)
    g_ref:  (1, D)       LayerNorm gamma
    be_ref: (1, D)       LayerNorm beta
    w1_ref: (D, th)      fc1 weight slice (compute dtype, e.g. bf16)
    b1_ref: (1, th)      fc1 bias slice
    w2_ref: (th, D)      fc2 weight slice (compute dtype)
    b2_ref: (1, D)       fc2 bias
    o_ref:  (tm, D)      output tile (written on last k)
    acc_ref:(tm, D)      f32 accumulator (VMEM scratch)
    xn_ref: (tm, D)      normalized x cache in compute dtype (VMEM scratch)
    """
    k = pl.program_id(1)

    # LayerNorm once per token tile; zero the fc2 accumulator.
    @pl.when(k == 0)
    def _():
        xf = x_ref[...].astype(jnp.float32)
        mu = jnp.mean(xf, axis=-1, keepdims=True)
        xc = xf - mu
        var = jnp.mean(xc * xc, axis=-1, keepdims=True)
        inv = jax.lax.rsqrt(var + eps)
        xn = xc * inv * g_ref[...].astype(jnp.float32) + be_ref[...].astype(jnp.float32)
        xn_ref[...] = xn.astype(compute_dtype)
        acc_ref[...] = jnp.zeros_like(acc_ref)

    # fc1 on this hidden slice: (tm, D) @ (D, th), bf16 inputs, f32 MXU accumulation.
    h = jnp.dot(xn_ref[...], w1_ref[...], preferred_element_type=jnp.float32)
    h = h + b1_ref[...].astype(jnp.float32)

    if use_tanh_gelu:
        # tanh-approx GELU: transcendental goes to the EUP slot (free next to MXU/VALU).
        # NOTE: numerics differ from torch.nn.GELU(approximate='none'); off by default.
        c = math.sqrt(2.0 / math.pi)
        h = 0.5 * h * (1.0 + jnp.tanh(c * (h + 0.044715 * (h * h * h))))
    else:
        # exact GELU (matches torch.nn.GELU() default), computed in f32.
        h = 0.5 * h * (1.0 + jax.lax.erf(h * (1.0 / math.sqrt(2.0))))

    # fc2 partial product over this hidden slice, accumulated in f32.
    acc_ref[...] += jnp.dot(h.astype(compute_dtype), w2_ref[...],
                            preferred_element_type=jnp.float32)

    # Epilogue: add fc2 bias + residual, single lane-dense store of the output tile.
    @pl.when(k == pl.num_programs(1) - 1)
    def _():
        y = acc_ref[...] + b2_ref[...].astype(jnp.float32)
        y = y + x_ref[...].astype(jnp.float32)          # residual: x + mlp(norm2(x))
        o_ref[...] = y.astype(o_ref.dtype)


def block_mlp_branch(x, gamma, beta, w1, b1, w2, b2, *, tm=512, th=512,
                     use_tanh_gelu=False, compute_dtype=jnp.bfloat16,
                     eps=1e-5, vmem_limit_bytes=None):
    """x: (B, N, D) -> (B, N, D).  Computes x + MLP(LayerNorm(x)) (dropout p=0.0).

    Weights are stored (in, out) so the kernel does x @ W (PyTorch stores (out, in)).
    """
    B, N, D = x.shape
    D_w, H = w1.shape
    H_w, D_out = w2.shape
    assert D_w == D and H_w == H and D_out == D, "Block MLP keeps the feature width"
    assert gamma.shape == (D,) and beta.shape == (D,)
    assert b1.shape == (H,) and b2.shape == (D_out,)

    M = B * N
    x2 = x.reshape(M, D)

    # Token tile: large (MXU-filling, amortizes grid-step overhead), multiple of 8,
    # never (much) larger than the sublane-rounded token count. Ragged last tile is
    # handled by the Pallas pipeline (masked writes) — no pad/slice around the kernel.
    tm_eff = max(8, min(_round_up(tm, 8), _round_up(M, 8)))
    grid_m = pl.cdiv(M, tm_eff)

    cbytes = jnp.dtype(compute_dtype).itemsize
    xbytes = jnp.dtype(x.dtype).itemsize
    cap = _vmem_capacity_bytes()

    def _need(th_e):
        return (2 * tm_eff * D * xbytes            # x tile (double-buffered)
                + tm_eff * D * cbytes              # normalized-x scratch
                + 2 * D * th_e * cbytes            # W1 slice (double-buffered)
                + 2 * th_e * D_out * cbytes        # W2 slice (double-buffered)
                + 2 * tm_eff * D_out * xbytes      # out tile (double-buffered)
                + tm_eff * D_out * 4               # f32 accumulator
                + 4 * (th_e + D_out + 2 * D) * 4)  # biases / gamma / beta (tiny)

    # Full-weight residency when it fits the generation's VMEM: the weight block
    # indices become grid-invariant and Pallas fetches them from HBM exactly once.
    if _need(H) <= int(0.6 * cap):
        th_eff = H
    else:
        th_eff = _largest_hidden_tile(H, th)

    if vmem_limit_bytes is None:
        vmem_limit_bytes = int(min(cap - (8 << 20),
                                   max(_need(th_eff) * 3 // 2, 32 << 20)))

    grid_k = H // th_eff
    grid = (grid_m, grid_k)

    # One-time weight cast to the MXU-native compute dtype (bf16): no per-step casts,
    # and half the weight DMA traffic vs f32.
    w1c = w1.astype(compute_dtype)
    w2c = w2.astype(compute_dtype)

    kernel = functools.partial(_block_mlp_kernel, use_tanh_gelu=use_tanh_gelu,
                               compute_dtype=compute_dtype, eps=eps)

    flops = 2 * M * D * H + 2 * M * H * D_out
    bytes_accessed = (M * D * xbytes + (D * H + H * D_out) * cbytes
                      + (H + D_out + 2 * D) * 4 + M * D_out * xbytes)

    out2 = pl.pallas_call(
        kernel,
        out_shape=jax.ShapeDtypeStruct((M, D_out), x.dtype),
        grid_spec=pltpu.PrefetchScalarGridSpec(
            num_scalar_prefetch=0,
            grid=grid,
            in_specs=[
                pl.BlockSpec((tm_eff, D), lambda i, k: (i, 0)),     # x tokens
                pl.BlockSpec((1, D), lambda i, k: (0, 0)),          # LN gamma
                pl.BlockSpec((1, D), lambda i, k: (0, 0)),          # LN beta
                pl.BlockSpec((D, th_eff), lambda i, k: (0, k)),     # W1 slice
                pl.BlockSpec((1, th_eff), lambda i, k: (0, k)),     # b1 slice
                pl.BlockSpec((th_eff, D_out), lambda i, k: (k, 0)), # W2 slice
                pl.BlockSpec((1, D_out), lambda i, k: (0, 0)),      # b2
            ],
            out_specs=pl.BlockSpec((tm_eff, D_out), lambda i, k: (i, 0)),
            scratch_shapes=[
                pltpu.VMEM((tm_eff, D_out), jnp.float32),   # fc2 accumulator
                pltpu.VMEM((tm_eff, D), compute_dtype),     # cached LayerNorm(x)
            ],
        ),
        compiler_params=pltpu.CompilerParams(
            # token axis parallel (shards across v7x's 2 TensorCores); hidden axis is a
            # reduction -> arbitrary, innermost.
            dimension_semantics=("parallel", "arbitrary"),
            vmem_limit_bytes=int(vmem_limit_bytes),
        ),
        cost_estimate=pl.CostEstimate(flops=int(flops),
                                      transcendentals=int(M * H),
                                      bytes_accessed=int(bytes_accessed)),
    )(x2, gamma.reshape(1, D), beta.reshape(1, D), w1c,
      b1.reshape(1, H), w2c, b2.reshape(1, D_out))

    return out2.reshape(B, N, D_out)


def init_params(key, in_features, hidden_features, out_features, dtype=jnp.float32):
    """Deterministic init mirroring nn.Linear (uniform +-1/sqrt(fan_in))."""
    k1, k2, k3, k4 = jax.random.split(key, 4)
    lim1 = 1.0 / math.sqrt(in_features)
    lim2 = 1.0 / math.sqrt(hidden_features)
    # stored as (in, out) so the kernel does x @ W (PyTorch stores (out, in))
    w1 = jax.random.uniform(k1, (in_features, hidden_features), dtype, -lim1, lim1)
    b1 = jax.random.uniform(k2, (hidden_features,), dtype, -lim1, lim1)
    w2 = jax.random.uniform(k3, (hidden_features, out_features), dtype, -lim2, lim2)
    b2 = jax.random.uniform(k4, (out_features,), dtype, -lim2, lim2)
    return w1, b1, w2, b2


if __name__ == "__main__":
    # Block(dim=128, mlp_ratio=4.0, t5_mlp=False, adaln=False) MLP branch:
    #   x + MLP(LayerNorm(x)) with MLP = (128 -> 512 -> 128), dropout p=0.0.
    B, N = 2, 75             # 150 tokens: exercises the ragged (masked) last row tile
    dim = 128                # lane-dense feature width (multiple of 128)
    hidden = int(dim * 4.0)  # 512

    key = jax.random.PRNGKey(0)
    kx, kg, kb, kp = jax.random.split(key, 4)
    x = jax.random.normal(kx, (B, N, dim), jnp.float32)
    gamma = 1.0 + 0.1 * jax.random.normal(kg, (dim,), jnp.float32)
    beta = 0.1 * jax.random.normal(kb, (dim,), jnp.float32)
    w1, b1, w2, b2 = init_params(kp, dim, hidden, dim)

    out = block_mlp_branch(x, gamma, beta, w1, b1, w2, b2)   # defaults: bf16 MXU, exact GELU
    out = jax.block_until_ready(out)
    assert out.shape == (B, N, dim)

    # plain-JAX reference with identical semantics (LayerNorm f32, bf16 matmul inputs,
    # f32 accumulation, exact GELU, dropout p=0.0 == identity, residual add).
    cd = jnp.bfloat16
    xf = x.astype(jnp.float32)
    mu = jnp.mean(xf, axis=-1, keepdims=True)
    var = jnp.mean((xf - mu) ** 2, axis=-1, keepdims=True)
    xn = (xf - mu) * jax.lax.rsqrt(var + 1e-5) * gamma + beta
    h_ref = jnp.dot(xn.astype(cd), w1.astype(cd), preferred_element_type=jnp.float32) + b1
    h_ref = 0.5 * h_ref * (1.0 + jax.lax.erf(h_ref / math.sqrt(2.0)))
    y_ref = jnp.dot(h_ref.astype(cd), w2.astype(cd), preferred_element_type=jnp.float32) + b2
    ref = xf + y_ref

    err = float(jnp.max(jnp.abs(out - ref)))
    assert jnp.allclose(out, ref, atol=5e-3, rtol=5e-3), f"max abs err = {err}"

    print("KERNEL_OK")
</pallas_src>

<mosaic_0001>
module attributes {stable_mosaic.version = 11 : i64} {
  func.func @_block_mlp_kernel(%arg0: i32, %arg1: i32, %arg2: memref<152x128xf32, #tpu.memory_space<vmem>>, %arg3: memref<1x128xf32, #tpu.memory_space<vmem>>, %arg4: memref<1x128xf32, #tpu.memory_space<vmem>>, %arg5: memref<128x512xbf16, #tpu.memory_space<vmem>>, %arg6: memref<1x512xf32, #tpu.memory_space<vmem>>, %arg7: memref<512x128xbf16, #tpu.memory_space<vmem>>, %arg8: memref<1x128xf32, #tpu.memory_space<vmem>>, %arg9: memref<152x128xf32, #tpu.memory_space<vmem>>, %arg10: memref<152x128xf32, #tpu.memory_space<vmem>>, %arg11: memref<152x128xbf16, #tpu.memory_space<vmem>>) attributes {dimension_semantics = [#tpu.dimension_semantics<parallel>, #tpu.dimension_semantics<arbitrary>], iteration_bounds = array<i64: 1, 1>, scalar_prefetch = 0 : i64, scratch_operands = 2 : i64, tpu.core_type = #tpu.core_type<tc>, window_params = [{transform_indices = @transform_0, window_bounds = array<i64: 152, 128>}, {pipeline_mode = #tpu.pipeline_mode<synchronous>, transform_indices = @transform_1, window_bounds = array<i64: 1, 128>}, {pipeline_mode = #tpu.pipeline_mode<synchronous>, transform_indices = @transform_2, window_bounds = array<i64: 1, 128>}, {transform_indices = @transform_3, window_bounds = array<i64: 128, 512>}, {transform_indices = @transform_4, window_bounds = array<i64: 1, 512>}, {transform_indices = @transform_5, window_bounds = array<i64: 512, 128>}, {pipeline_mode = #tpu.pipeline_mode<synchronous>, transform_indices = @transform_6, window_bounds = array<i64: 1, 128>}, {transform_indices = @transform_7, window_bounds = array<i64: 152, 128>}]} {
    %c0_i32 = arith.constant 0 : i32
    %0 = arith.cmpi eq, %arg1, %c0_i32 : i32
    %1 = arith.extui %0 : i1 to i32
    %c0_i32_0 = arith.constant 0 : i32
    %2 = arith.cmpi ne, %1, %c0_i32_0 : i32
    scf.if %2 {
      %c0_18 = arith.constant 0 : index
      %c0_19 = arith.constant 0 : index
      %26 = vector.load %arg2[%c0_18, %c0_19] : memref<152x128xf32, #tpu.memory_space<vmem>>, vector<152x128xf32>
      %cst_20 = arith.constant dense<0.000000e+00> : vector<152xf32>
      %27 = vector.multi_reduction <add>, %26, %cst_20 [1] : vector<152x128xf32> to vector<152xf32>
      %28 = vector.shape_cast %27 : vector<152xf32> to vector<152x1xf32>
      %cst_21 = arith.constant 1.280000e+02 : f32
      %29 = vector.broadcast %cst_21 : f32 to vector<152x1xf32>
      %30 = arith.divf %28, %29 : vector<152x1xf32>
      %31 = vector.broadcast %30 : vector<152x1xf32> to vector<152x128xf32>
      %32 = arith.subf %26, %31 : vector<152x128xf32>
      %33 = arith.mulf %32, %32 : vector<152x128xf32>
      %cst_22 = arith.constant dense<0.000000e+00> : vector<152xf32>
      %34 = vector.multi_reduction <add>, %33, %cst_22 [1] : vector<152x128xf32> to vector<152xf32>
      %35 = vector.shape_cast %34 : vector<152xf32> to vector<152x1xf32>
      %cst_23 = arith.constant 1.280000e+02 : f32
      %36 = vector.broadcast %cst_23 : f32 to vector<152x1xf32>
      %37 = arith.divf %35, %36 : vector<152x1xf32>
      %cst_24 = arith.constant 9.99999974E-6 : f32
      %38 = vector.broadcast %cst_24 : f32 to vector<152x1xf32>
      %39 = arith.addf %37, %38 : vector<152x1xf32>
      %40 = math.rsqrt %39 : vector<152x1xf32>
      %41 = vector.broadcast %40 : vector<152x1xf32> to vector<152x128xf32>
      %42 = arith.mulf %32, %41 : vector<152x128xf32>
      %c0_25 = arith.constant 0 : index
      %c0_26 = arith.constant 0 : index
      %43 = vector.load %arg3[%c0_25, %c0_26] : memref<1x128xf32, #tpu.memory_space<vmem>>, vector<1x128xf32>
      %44 = vector.broadcast %43 : vector<1x128xf32> to vector<152x128xf32>
      %45 = arith.mulf %42, %44 : vector<152x128xf32>
      %c0_27 = arith.constant 0 : index
      %c0_28 = arith.constant 0 : index
      %46 = vector.load %arg4[%c0_27, %c0_28] : memref<1x128xf32, #tpu.memory_space<vmem>>, vector<1x128xf32>
      %47 = vector.broadcast %46 : vector<1x128xf32> to vector<152x128xf32>
      %48 = arith.addf %45, %47 : vector<152x128xf32>
      %49 = arith.truncf %48 : vector<152x128xf32> to vector<152x128xbf16>
      %c0_29 = arith.constant 0 : index
      %c0_30 = arith.constant 0 : index
      %50 = vector.load %arg11[%c0_29, %c0_30] : memref<152x128xbf16, #tpu.memory_space<vmem>>, vector<152x128xbf16>
      tpu.vector_store %arg11[%c0_29, %c0_30], %49 {strides = array<i32>} : memref<152x128xbf16, #tpu.memory_space<vmem>>, vector<152x128xbf16>,
      %cst_31 = arith.constant 0.000000e+00 : f32
      %51 = vector.broadcast %cst_31 : f32 to vector<152x128xf32>
      %c0_32 = arith.constant 0 : index
      %c0_33 = arith.constant 0 : index
      %52 = vector.load %arg10[%c0_32, %c0_33] : memref<152x128xf32, #tpu.memory_space<vmem>>, vector<152x128xf32>
      tpu.vector_store %arg10[%c0_32, %c0_33], %51 {strides = array<i32>} : memref<152x128xf32, #tpu.memory_space<vmem>>, vector<152x128xf32>,
    } else {
    }
    %c0 = arith.constant 0 : index
    %c0_1 = arith.constant 0 : index
    %3 = vector.load %arg11[%c0, %c0_1] : memref<152x128xbf16, #tpu.memory_space<vmem>>, vector<152x128xbf16>
    %c0_2 = arith.constant 0 : index
    %c0_3 = arith.constant 0 : index
    %4 = vector.load %arg5[%c0_2, %c0_3] : memref<128x512xbf16, #tpu.memory_space<vmem>>, vector<128x512xbf16>
    %cst = arith.constant dense<0.000000e+00> : vector<152x512xf32>
    %5 = tpu.matmul %3, %4, %cst {dimension_numbers = #tpu.dot_dimension_numbers<[1], [0], [0], [1], [0, 0, 1, 1], [], []>} : vector<152x128xbf16>, vector<128x512xbf16>, vector<152x512xf32> -> vector<152x512xf32>
    %c0_4 = arith.constant 0 : index
    %c0_5 = arith.constant 0 : index
    %6 = vector.load %arg6[%c0_4, %c0_5] : memref<1x512xf32, #tpu.memory_space<vmem>>, vector<1x512xf32>
    %7 = vector.broadcast %6 : vector<1x512xf32> to vector<152x512xf32>
    %8 = arith.addf %5, %7 : vector<152x512xf32>
    %cst_6 = arith.constant 5.000000e-01 : f32
    %9 = vector.broadcast %cst_6 : f32 to vector<152x512xf32>
    %10 = arith.mulf %9, %8 : vector<152x512xf32>
    %cst_7 = arith.constant 0.707106769 : f32
    %11 = vector.broadcast %cst_7 : f32 to vector<152x512xf32>
    %12 = arith.mulf %8, %11 : vector<152x512xf32>
    %13 = math.erf %12 : vector<152x512xf32>
    %cst_8 = arith.constant 1.000000e+00 : f32
    %14 = vector.broadcast %cst_8 : f32 to vector<152x512xf32>
    %15 = arith.addf %14, %13 : vector<152x512xf32>
    %16 = arith.mulf %10, %15 : vector<152x512xf32>
    %c0_9 = arith.constant 0 : index
    %c0_10 = arith.constant 0 : index
    %17 = vector.load %arg10[%c0_9, %c0_10] : memref<152x128xf32, #tpu.memory_space<vmem>>, vector<152x128xf32>
    %18 = arith.truncf %16 : vector<152x512xf32> to vector<152x512xbf16>
    %c0_11 = arith.constant 0 : index
    %c0_12 = arith.constant 0 : index
    %19 = vector.load %arg7[%c0_11, %c0_12] : memref<512x128xbf16, #tpu.memory_space<vmem>>, vector<512x128xbf16>
    %cst_13 = arith.constant dense<0.000000e+00> : vector<152x128xf32>
    %20 = tpu.matmul %18, %19, %cst_13 {dimension_numbers = #tpu.dot_dimension_numbers<[1], [0], [0], [1], [0, 0, 1, 1], [], []>} : vector<152x512xbf16>, vector<512x128xbf16>, vector<152x128xf32> -> vector<152x128xf32>
    %21 = arith.addf %17, %20 : vector<152x128xf32>
    %c0_14 = arith.constant 0 : index
    %c0_15 = arith.constant 0 : index
    %22 = vector.load %arg10[%c0_14, %c0_15] : memref<152x128xf32, #tpu.memory_space<vmem>>, vector<152x128xf32>
    tpu.vector_store %arg10[%c0_14, %c0_15], %21 {strides = array<i32>} : memref<152x128xf32, #tpu.memory_space<vmem>>, vector<152x128xf32>,
    %c0_i32_16 = arith.constant 0 : i32
    %23 = arith.cmpi eq, %arg1, %c0_i32_16 : i32
    %24 = arith.extui %23 : i1 to i32
    %c0_i32_17 = arith.constant 0 : i32
    %25 = arith.cmpi ne, %24, %c0_i32_17 : i32
    scf.if %25 {
      %c0_18 = arith.constant 0 : index
      %c0_19 = arith.constant 0 : index
      %26 = vector.load %arg10[%c0_18, %c0_19] : memref<152x128xf32, #tpu.memory_space<vmem>>, vector<152x128xf32>
      %c0_20 = arith.constant 0 : index
      %c0_21 = arith.constant 0 : index
      %27 = vector.load %arg8[%c0_20, %c0_21] : memref<1x128xf32, #tpu.memory_space<vmem>>, vector<1x128xf32>
      %28 = vector.broadcast %27 : vector<1x128xf32> to vector<152x128xf32>
      %29 = arith.addf %26, %28 : vector<152x128xf32>
      %c0_22 = arith.constant 0 : index
      %c0_23 = arith.constant 0 : index
      %30 = vector.load %arg2[%c0_22, %c0_23] : memref<152x128xf32, #tpu.memory_space<vmem>>, vector<152x128xf32>
      %31 = arith.addf %29, %30 : vector<152x128xf32>
      %c0_24 = arith.constant 0 : index
      %c0_25 = arith.constant 0 : index
      %32 = vector.load %arg9[%c0_24, %c0_25] : memref<152x128xf32, #tpu.memory_space<vmem>>, vector<152x128xf32>
      tpu.vector_store %arg9[%c0_24, %c0_25], %31 {strides = array<i32>} : memref<152x128xf32, #tpu.memory_space<vmem>>, vector<152x128xf32>,
    } else {
    }
    return
  }
  func.func @transform_0(%arg0: i32, %arg1: i32) -> (i32, i32) {
    %c0_i32 = arith.constant 0 : i32
    %c0_i32_0 = arith.constant 0 : i32
    return %arg0, %c0_i32 : i32, i32
  }
  func.func @transform_1(%arg0: i32, %arg1: i32) -> (i32, i32) {
    %c0_i32 = arith.constant 0 : i32
    %c0_i32_0 = arith.constant 0 : i32
    %c0_i32_1 = arith.constant 0 : i32
    return %c0_i32, %c0_i32_0 : i32, i32
  }
  func.func @transform_2(%arg0: i32, %arg1: i32) -> (i32, i32) {
    %c0_i32 = arith.constant 0 : i32
    %c0_i32_0 = arith.constant 0 : i32
    %c0_i32_1 = arith.constant 0 : i32
    return %c0_i32, %c0_i32_0 : i32, i32
  }
  func.func @transform_3(%arg0: i32, %arg1: i32) -> (i32, i32) {
    %c0_i32 = arith.constant 0 : i32
    %c0_i32_0 = arith.constant 0 : i32
    return %c0_i32, %arg1 : i32, i32
  }
  func.func @transform_4(%arg0: i32, %arg1: i32) -> (i32, i32) {
    %c0_i32 = arith.constant 0 : i32
    %c0_i32_0 = arith.constant 0 : i32
    return %c0_i32, %arg1 : i32, i32
  }
  func.func @transform_5(%arg0: i32, %arg1: i32) -> (i32, i32) {
    %c0_i32 = arith.constant 0 : i32
    %c0_i32_0 = arith.constant 0 : i32
    return %arg1, %c0_i32 : i32, i32
  }
  func.func @transform_6(%arg0: i32, %arg1: i32) -> (i32, i32) {
    %c0_i32 = arith.constant 0 : i32
    %c0_i32_0 = arith.constant 0 : i32
    %c0_i32_1 = arith.constant 0 : i32
    return %c0_i32, %c0_i32_0 : i32, i32
  }
  func.func @transform_7(%arg0: i32, %arg1: i32) -> (i32, i32) {
    %c0_i32 = arith.constant 0 : i32
    %c0_i32_0 = arith.constant 0 : i32
    return %arg0, %c0_i32 : i32, i32
  }
}

</mosaic_0001>

<llo_original>
// kernel: tpu_custom_call.1
$region0: #{tpu_custom_call.1}
  #allocation0 [shape = 'u32[]', space=smem, size = 0x4, offset = 0x4, fixed_abs, tag = 'smem constant byte address 0x4 - core index']
  #allocation1 [shape = 'u32[144,128]{1,0:T(1,128)}', space=vmem, size = 0x12000, scoped, tag = 'internal scratch']
  #allocation2 [shape = 'f32[152,128]{1,0:T(8,128)}', space=vmem, size = 0x13000, scoped, tag = 'scratch operand']
  #allocation3 [shape = 'bf16[152,128]{1,0:T(8,128)(2,1)}', space=vmem, size = 0x9800, scoped, tag = 'scratch operand']
  %s0 = inlined_call_operand.hbm [shape: f32[150,128], index: 0, kind: input, shape index: {}]
  %s1 = inlined_call_operand.vmem [shape: f32[1,128], index: 1, kind: input, shape index: {}]
  %s2 = inlined_call_operand.vmem [shape: f32[1,128], index: 2, kind: input, shape index: {}]
  %s3 = inlined_call_operand.hbm [shape: bf16[128,512], index: 3, kind: input, shape index: {}]
  %s4 = inlined_call_operand.vmem [shape: f32[1,512], index: 4, kind: input, shape index: {}]
  %s5 = inlined_call_operand.hbm [shape: bf16[512,128], index: 5, kind: input, shape index: {}]
  %s6 = inlined_call_operand.vmem [shape: f32[1,128], index: 6, kind: input, shape index: {}]
  %s7 = inlined_call_operand.hbm [shape: f32[150,128], index: 7, kind: output, shape index: {}]
  %s8 = sld [smem:[#allocation0]]
  $region58: #{tpu_custom_call.1} parent=0
    _
  %s10 = ssub.s32 1, %s8
  %s11 = scalar_select 0, %s10, %s8
  $region1: #{tpu_custom_call.1} parent=0
    #allocation4 [shape = 'u8[77824]{0}', space=vmem, size = 0x13000, scoped, tag = 'input window, operand 0, single buffered']
    #allocation5 [shape = 's32[1]{0}', space=sflag, size = 0x4, scoped, tag = 'scoped memory for tpu_custom_call.1']
    #allocation6 [shape = 's32[1]{0}', space=sflag, size = 0x4, scoped, tag = 'scoped memory for tpu_custom_call.1']
    #allocation7 [shape = 'u8[131072]{0}', space=vmem, size = 0x20000, scoped, tag = 'input window, operand 3, single buffered']
    #allocation8 [shape = 's32[1]{0}', space=sflag, size = 0x4, scoped, tag = 'scoped memory for tpu_custom_call.1']
    #allocation9 [shape = 'u8[131072]{0}', space=vmem, size = 0x20000, scoped, tag = 'input window, operand 5, single buffered']
    #allocation10 [shape = 'u8[77824]{0}', space=vmem, size = 0x13000, scoped, tag = 'output window, operand 0, single buffered']
    %12 = vsyncpa [#allocation5], 0
    %13 = vsyncpa [#allocation8], 0
    %14 = vsyncpa [#allocation6], 0
    // Predicated region
    $region2: #{tpu_custom_call.1} parent=1 // pred_check
      _
    $region3: #{tpu_custom_call.1} parent=1 // pred_check_branch
      %16 = sbr.rel (0) target = $region5
    $region4: #{tpu_custom_call.1} parent=1 // pred_region
      %s18 = ssub.s32 2432, 2432
      %19 = vsyncadd [#allocation5], %s18
      %s20 = sshll.u32 [#allocation4], 4
      %s21 = int_to_ptr.vmem [resolvable:$true] %s20
      %26 = dma.hbm_to_vmem [thread:$0]  %s0, 2432, %s21, [#allocation5], 128, 128, 8
    $region5: #{tpu_custom_call.1} parent=1 // pred_fallthru
      _
    // Predicated region
    $region6: #{tpu_custom_call.1} parent=1 // pred_check
      _
    $region7: #{tpu_custom_call.1} parent=1 // pred_check_branch
      %28 = sbr.rel (0) target = $region9
    $region8: #{tpu_custom_call.1} parent=1 // pred_region
      _
    $region9: #{tpu_custom_call.1} parent=1 // pred_fallthru
      _
    // Predicated region
    $region10: #{tpu_custom_call.1} parent=1 // pred_check
      _
    $region11: #{tpu_custom_call.1} parent=1 // pred_check_branch
      %30 = sbr.rel (0) target = $region13
    $region12: #{tpu_custom_call.1} parent=1 // pred_region
      _
    $region13: #{tpu_custom_call.1} parent=1 // pred_fallthru
      _
    // Predicated region
    $region14: #{tpu_custom_call.1} parent=1 // pred_check
      _
    $region15: #{tpu_custom_call.1} parent=1 // pred_check_branch
      %32 = sbr.rel (0) target = $region17
    $region16: #{tpu_custom_call.1} parent=1 // pred_region
      %s34 = ssub.s32 4096, 4096
      %35 = vsyncadd [#allocation8], %s34
      %s36 = sshll.u32 [#allocation7], 4
      %s37 = int_to_ptr.vmem [resolvable:$true] %s36
      %42 = dma.hbm_to_vmem [thread:$0]  %s3, 4096, %s37, [#allocation8], 256, 256, 16
    $region17: #{tpu_custom_call.1} parent=1 // pred_fallthru
      _
    // Predicated region
    $region18: #{tpu_custom_call.1} parent=1 // pred_check
      _
    $region19: #{tpu_custom_call.1} parent=1 // pred_check_branch
      %44 = sbr.rel (0) target = $region21
    $region20: #{tpu_custom_call.1} parent=1 // pred_region
      _
    $region21: #{tpu_custom_call.1} parent=1 // pred_fallthru
      _
    // Predicated region
    $region22: #{tpu_custom_call.1} parent=1 // pred_check
      _
    $region23: #{tpu_custom_call.1} parent=1 // pred_check_branch
      %46 = sbr.rel (0) target = $region25
    $region24: #{tpu_custom_call.1} parent=1 // pred_region
      %s48 = ssub.s32 4096, 4096
      %49 = vsyncadd [#allocation8], %s48
      %s50 = sshll.u32 [#allocation9], 4
      %s51 = int_to_ptr.vmem [resolvable:$true] %s50
      %56 = dma.hbm_to_vmem [thread:$0]  %s5, 4096, %s51, [#allocation8], 64, 64, 4
    $region25: #{tpu_custom_call.1} parent=1 // pred_fallthru
      _
    // Predicated region
    $region26: #{tpu_custom_call.1} parent=1 // pred_check
      _
    $region27: #{tpu_custom_call.1} parent=1 // pred_check_branch
      %58 = sbr.rel (0) target = $region29
    $region28: #{tpu_custom_call.1} parent=1 // pred_region
      _
    $region29: #{tpu_custom_call.1} parent=1 // pred_fallthru
      _
    // Predicated region
    $region30: #{tpu_custom_call.1} parent=1 // pred_check
      _
    $region31: #{tpu_custom_call.1} parent=1 // pred_check_branch
      %60 = sbr.rel (0) target = $region33
    $region32: #{tpu_custom_call.1} parent=1 // pred_region
      %61 = dma.done [#allocation5], 2432
    $region33: #{tpu_custom_call.1} parent=1 // pred_fallthru
      _
    // Predicated region
    $region34: #{tpu_custom_call.1} parent=1 // pred_check
      _
    $region35: #{tpu_custom_call.1} parent=1 // pred_check_branch
      %63 = sbr.rel (0) target = $region37
    $region36: #{tpu_custom_call.1} parent=1 // pred_region
      %64 = dma.done [#allocation8], 4096
    $region37: #{tpu_custom_call.1} parent=1 // pred_fallthru
      _
    // Predicated region
    $region38: #{tpu_custom_call.1} parent=1 // pred_check
      _
    $region39: #{tpu_custom_call.1} parent=1 // pred_check_branch
      %66 = sbr.rel (0) target = $region41
    $region40: #{tpu_custom_call.1} parent=1 // pred_region
      %67 = dma.done [#allocation8], 4096
    $region41: #{tpu_custom_call.1} parent=1 // pred_fallthru
      _
    %p69 = scmp.eq.s32.totalorder 0, 0
    // Predicated region
    $region42: #{tpu_custom_call.1} parent=1 // pred_check
      %p70 = pneg %p69
    $region43: #{tpu_custom_call.1} parent=1 // pred_check_branch
      %72 = sbr.rel (%p70) target = $region45
    $region44: #{tpu_custom_call.1} parent=1 // pred_region
      %v73 = vld [vmem:[#allocation4] sm:$0xff]
      %v74 = vld [vmem:[#allocation4 + $0x8] sm:$0xff]
      %v75 = vld [vmem:[#allocation4 + $0x10] sm:$0xff]
      %v76 = vld [vmem:[#allocation4 + $0x18] sm:$0xff]
      %v77 = vld [vmem:[#allocation4 + $0x20] sm:$0xff]
      %v78 = vld [vmem:[#allocation4 + $0x28] sm:$0xff]
      %v79 = vld [vmem:[#allocation4 + $0x30] sm:$0xff]
      %v80 = vld [vmem:[#allocation4 + $0x38] sm:$0xff]
      %v81 = vld [vmem:[#allocation4 + $0x40] sm:$0xff]
      %v82 = vld [vmem:[#allocation4 + $0x48] sm:$0xff]
      %v83 = vld [vmem:[#allocation4 + $0x50] sm:$0xff]
      %v84 = vld [vmem:[#allocation4 + $0x58] sm:$0xff]
      %v85 = vld [vmem:[#allocation4 + $0x60] sm:$0xff]
      %v86 = vld [vmem:[#allocation4 + $0x68] sm:$0xff]
      %v87 = vld [vmem:[#allocation4 + $0x70] sm:$0xff]
      %v88 = vld [vmem:[#allocation4 + $0x78] sm:$0xff]
      %v89 = vld [vmem:[#allocation4 + $0x80] sm:$0xff]
      %v90 = vld [vmem:[#allocation4 + $0x88] sm:$0xff]
      %v91 = vld [vmem:[#allocation4 + $0x90] sm:$0xff]
      %92 = vadd.xlane.f32.xlu0 %v73
      %v93 = vpop.xlane.xlu0 %92
      %94 = vadd.xlane.f32.xlu0 %v74
      %v95 = vpop.xlane.xlu0 %94
      %96 = vadd.xlane.f32.xlu0 %v75
      %v97 = vpop.xlane.xlu0 %96
      %98 = vadd.xlane.f32.xlu0 %v76
      %v99 = vpop.xlane.xlu0 %98
      %100 = vadd.xlane.f32.xlu0 %v77
      %v101 = vpop.xlane.xlu0 %100
      %102 = vadd.xlane.f32.xlu0 %v78
      %v103 = vpop.xlane.xlu0 %102
      %104 = vadd.xlane.f32.xlu0 %v79
      %v105 = vpop.xlane.xlu0 %104
      %106 = vadd.xlane.f32.xlu0 %v80
      %v107 = vpop.xlane.xlu0 %106
      %108 = vadd.xlane.f32.xlu0 %v81
      %v109 = vpop.xlane.xlu0 %108
      %110 = vadd.xlane.f32.xlu0 %v82
      %v111 = vpop.xlane.xlu0 %110
      %112 = vadd.xlane.f32.xlu0 %v83
      %v113 = vpop.xlane.xlu0 %112
      %114 = vadd.xlane.f32.xlu0 %v84
      %v115 = vpop.xlane.xlu0 %114
      %116 = vadd.xlane.f32.xlu0 %v85
      %v117 = vpop.xlane.xlu0 %116
      %118 = vadd.xlane.f32.xlu0 %v86
      %v119 = vpop.xlane.xlu0 %118
      %120 = vadd.xlane.f32.xlu0 %v87
      %v121 = vpop.xlane.xlu0 %120
      %122 = vadd.xlane.f32.xlu0 %v88
      %v123 = vpop.xlane.xlu0 %122
      %124 = vadd.xlane.f32.xlu0 %v89
      %v125 = vpop.xlane.xlu0 %124
      %126 = vadd.xlane.f32.xlu0 %v90
      %v127 = vpop.xlane.xlu0 %126
      %128 = vadd.xlane.f32.xlu0 %v91
      %v129 = vpop.xlane.xlu0 %128
      %v130 = vrcp.pop 128.0
      %v131 = vmul.f32 %v93, %v130
      %v132 = vmul.f32 %v95, %v130
      %v133 = vmul.f32 %v97, %v130
      %v134 = vmul.f32 %v99, %v130
      %v135 = vmul.f32 %v101, %v130
      %v136 = vmul.f32 %v103, %v130
      %v137 = vmul.f32 %v105, %v130
      %v138 = vmul.f32 %v107, %v130
      %v139 = vmul.f32 %v109, %v130
      %v140 = vmul.f32 %v111, %v130
      %v141 = vmul.f32 %v113, %v130
      %v142 = vmul.f32 %v115, %v130
      %v143 = vmul.f32 %v117, %v130
      %v144 = vmul.f32 %v119, %v130
      %v145 = vmul.f32 %v121, %v130
      %v146 = vmul.f32 %v123, %v130
      %v147 = vmul.f32 %v125, %v130
      %v148 = vmul.f32 %v127, %v130
      %v149 = vmul.f32 %v129, %v130
      %v150 = vsub.f32 %v73, %v131
      %v151 = vsub.f32 %v74, %v132
      %v152 = vsub.f32 %v75, %v133
      %v153 = vsub.f32 %v76, %v134
      %v154 = vsub.f32 %v77, %v135
      %v155 = vsub.f32 %v78, %v136
      %v156 = vsub.f32 %v79, %v137
      %v157 = vsub.f32 %v80, %v138
      %v158 = vsub.f32 %v81, %v139
      %v159 = vsub.f32 %v82, %v140
      %v160 = vsub.f32 %v83, %v141
      %v161 = vsub.f32 %v84, %v142
      %v162 = vsub.f32 %v85, %v143
      %v163 = vsub.f32 %v86, %v144
      %v164 = vsub.f32 %v87, %v145
      %v165 = vsub.f32 %v88, %v146
      %v166 = vsub.f32 %v89, %v147
      %v167 = vsub.f32 %v90, %v148
      %v168 = vsub.f32 %v91, %v149
      %v169 = vmul.f32 %v150, %v150
      %v170 = vmul.f32 %v151, %v151
      %v171 = vmul.f32 %v152, %v152
      %v172 = vmul.f32 %v153, %v153
      %v173 = vmul.f32 %v154, %v154
      %v174 = vmul.f32 %v155, %v155
      %v175 = vmul.f32 %v156, %v156
      %v176 = vmul.f32 %v157, %v157
      %v177 = vmul.f32 %v158, %v158
      %v178 = vmul.f32 %v159, %v159
      %v179 = vmul.f32 %v160, %v160
      %v180 = vmul.f32 %v161, %v161
      %v181 = vmul.f32 %v162, %v162
      %v182 = vmul.f32 %v163, %v163
      %v183 = vmul.f32 %v164, %v164
      %v184 = vmul.f32 %v165, %v165
      %v185 = vmul.f32 %v166, %v166
      %v186 = vmul.f32 %v167, %v167
      %v187 = vmul.f32 %v168, %v168
      %188 = vadd.xlane.f32.xlu0 %v169
      %v189 = vpop.xlane.xlu0 %188
      %190 = vadd.xlane.f32.xlu0 %v170
      %v191 = vpop.xlane.xlu0 %190
      %192 = vadd.xlane.f32.xlu0 %v171
      %v193 = vpop.xlane.xlu0 %192
      %194 = vadd.xlane.f32.xlu0 %v172
      %v195 = vpop.xlane.xlu0 %194
      %196 = vadd.xlane.f32.xlu0 %v173
      %v197 = vpop.xlane.xlu0 %196
      %198 = vadd.xlane.f32.xlu0 %v174
      %v199 = vpop.xlane.xlu0 %198
      %200 = vadd.xlane.f32.xlu0 %v175
      %v201 = vpop.xlane.xlu0 %200
      %202 = vadd.xlane.f32.xlu0 %v176
      %v203 = vpop.xlane.xlu0 %202
      %204 = vadd.xlane.f32.xlu0 %v177
      %v205 = vpop.xlane.xlu0 %204
      %206 = vadd.xlane.f32.xlu0 %v178
      %v207 = vpop.xlane.xlu0 %206
      %208 = vadd.xlane.f32.xlu0 %v179
      %v209 = vpop.xlane.xlu0 %208
      %210 = vadd.xlane.f32.xlu0 %v180
      %v211 = vpop.xlane.xlu0 %210
      %212 = vadd.xlane.f32.xlu0 %v181
      %v213 = vpop.xlane.xlu0 %212
      %214 = vadd.xlane.f32.xlu0 %v182
      %v215 = vpop.xlane.xlu0 %214
      %216 = vadd.xlane.f32.xlu0 %v183
      %v217 = vpop.xlane.xlu0 %216
      %218 = vadd.xlane.f32.xlu0 %v184
      %v219 = vpop.xlane.xlu0 %218
      %220 = vadd.xlane.f32.xlu0 %v185
      %v221 = vpop.xlane.xlu0 %220
      %222 = vadd.xlane.f32.xlu0 %v186
      %v223 = vpop.xlane.xlu0 %222
      %224 = vadd.xlane.f32.xlu0 %v187
      %v225 = vpop.xlane.xlu0 %224
      %v226 = vmul.f32 %v189, %v130
      %v227 = vmul.f32 %v191, %v130
      %v228 = vmul.f32 %v193, %v130
      %v229 = vmul.f32 %v195, %v130
      %v230 = vmul.f32 %v197, %v130
      %v231 = vmul.f32 %v199, %v130
      %v232 = vmul.f32 %v201, %v130
      %v233 = vmul.f32 %v203, %v130
      %v234 = vmul.f32 %v205, %v130
      %v235 = vmul.f32 %v207, %v130
      %v236 = vmul.f32 %v209, %v130
      %v237 = vmul.f32 %v211, %v130
      %v238 = vmul.f32 %v213, %v130
      %v239 = vmul.f32 %v215, %v130
      %v240 = vmul.f32 %v217, %v130
      %v241 = vmul.f32 %v219, %v130
      %v242 = vmul.f32 %v221, %v130
      %v243 = vmul.f32 %v223, %v130
      %v244 = vmul.f32 %v225, %v130
      %v245 = vadd.f32 %v226, 1e-05
      %v246 = vadd.f32 %v227, 1e-05
      %v247 = vadd.f32 %v228, 1e-05
      %v248 = vadd.f32 %v229, 1e-05
      %v249 = vadd.f32 %v230, 1e-05
      %v250 = vadd.f32 %v231, 1e-05
      %v251 = vadd.f32 %v232, 1e-05
      %v252 = vadd.f32 %v233, 1e-05
      %v253 = vadd.f32 %v234, 1e-05
      %v254 = vadd.f32 %v235, 1e-05
      %v255 = vadd.f32 %v236, 1e-05
      %v256 = vadd.f32 %v237, 1e-05
      %v257 = vadd.f32 %v238, 1e-05
      %v258 = vadd.f32 %v239, 1e-05
      %v259 = vadd.f32 %v240, 1e-05
      %v260 = vadd.f32 %v241, 1e-05
      %v261 = vadd.f32 %v242, 1e-05
      %v262 = vadd.f32 %v243, 1e-05
      %v263 = vadd.f32 %v244, 1e-05
      %v264 = vrsqrt.pop %v245
      %v265 = vrsqrt.pop %v246
      %v266 = vrsqrt.pop %v247
      %v267 = vrsqrt.pop %v248
      %v268 = vrsqrt.pop %v249
      %v269 = vrsqrt.pop %v250
      %v270 = vrsqrt.pop %v251
      %v271 = vrsqrt.pop %v252
      %v272 = vrsqrt.pop %v253
      %v273 = vrsqrt.pop %v254
      %v274 = vrsqrt.pop %v255
      %v275 = vrsqrt.pop %v256
      %v276 = vrsqrt.pop %v257
      %v277 = vrsqrt.pop %v258
      %v278 = vrsqrt.pop %v259
      %v279 = vrsqrt.pop %v260
      %v280 = vrsqrt.pop %v261
      %v281 = vrsqrt.pop %v262
      %v282 = vrsqrt.pop %v263
      %v283 = vmul.f32 %v150, %v264
      %v284 = vmul.f32 %v151, %v265
      %v285 = vmul.f32 %v152, %v266
      %v286 = vmul.f32 %v153, %v267
      %v287 = vmul.f32 %v154, %v268
      %v288 = vmul.f32 %v155, %v269
      %v289 = vmul.f32 %v156, %v270
      %v290 = vmul.f32 %v157, %v271
      %v291 = vmul.f32 %v158, %v272
      %v292 = vmul.f32 %v159, %v273
      %v293 = vmul.f32 %v160, %v274
      %v294 = vmul.f32 %v161, %v275
      %v295 = vmul.f32 %v162, %v276
      %v296 = vmul.f32 %v163, %v277
      %v297 = vmul.f32 %v164, %v278
      %v298 = vmul.f32 %v165, %v279
      %v299 = vmul.f32 %v166, %v280
      %v300 = vmul.f32 %v167, %v281
      %v301 = vmul.f32 %v168, %v282
      %v302 = vld [vmem:[%s1] sm:$0x1]
      %v304 = vlaneseq
      %v305 = vshrl.u32 %v304, 7
      %v306 = vsub.s32 0, %v305
      %v307 = vrot.slane %v302, %v306
      %v309 = vmul.f32 %v283, %v307
      %v310 = vmul.f32 %v284, %v307
      %v311 = vmul.f32 %v285, %v307
      %v312 = vmul.f32 %v286, %v307
      %v313 = vmul.f32 %v287, %v307
      %v314 = vmul.f32 %v288, %v307
      %v315 = vmul.f32 %v289, %v307
      %v316 = vmul.f32 %v290, %v307
      %v317 = vmul.f32 %v291, %v307
      %v318 = vmul.f32 %v292, %v307
      %v319 = vmul.f32 %v293, %v307
      %v320 = vmul.f32 %v294, %v307
      %v321 = vmul.f32 %v295, %v307
      %v322 = vmul.f32 %v296, %v307
      %v323 = vmul.f32 %v297, %v307
      %v324 = vmul.f32 %v298, %v307
      %v325 = vmul.f32 %v299, %v307
      %v326 = vmul.f32 %v300, %v307
      %v327 = vmul.f32 %v301, %v307
      %v328 = vld [vmem:[%s2] sm:$0x1]
      %v330 = vlaneseq
      %v331 = vshrl.u32 %v330, 7
      %v332 = vsub.s32 0, %v331
      %v333 = vrot.slane %v328, %v332
      %v335 = vadd.f32 %v309, %v333
      %v336 = vadd.f32 %v310, %v333
      %v337 = vadd.f32 %v311, %v333
      %v338 = vadd.f32 %v312, %v333
      %v339 = vadd.f32 %v313, %v333
      %v340 = vadd.f32 %v314, %v333
      %v341 = vadd.f32 %v315, %v333
      %v342 = vadd.f32 %v316, %v333
      %v343 = vadd.f32 %v317, %v333
      %v344 = vadd.f32 %v318, %v333
      %v345 = vadd.f32 %v319, %v333
      %v346 = vadd.f32 %v320, %v333
      %v347 = vadd.f32 %v321, %v333
      %v348 = vadd.f32 %v322, %v333
      %v349 = vadd.f32 %v323, %v333
      %v350 = vadd.f32 %v324, %v333
      %v351 = vadd.f32 %v325, %v333
      %v352 = vadd.f32 %v326, %v333
      %v353 = vadd.f32 %v327, %v333
      %v354 = vpack.c.bf16 %v336, %v335
      %v355 = vpack.c.bf16 %v338, %v337
      %v356 = vpack.c.bf16 %v340, %v339
      %v357 = vpack.c.bf16 %v342, %v341
      %v358 = vpack.c.bf16 %v344, %v343
      %v359 = vpack.c.bf16 %v346, %v345
      %v360 = vpack.c.bf16 %v348, %v347
      %v361 = vpack.c.bf16 %v350, %v349
      %v362 = vpack.c.bf16 %v352, %v351
      %v363 = vpack.c.bf16 %v353, %v353
      %v374 = vunpack.c.l.b16 %v354
      %v375 = vunpack.c.h.b16 %v354
      %v376 = vunpack.c.l.b16 %v355
      %v377 = vunpack.c.h.b16 %v355
      %v378 = vunpack.c.l.b16 %v356
      %v379 = vunpack.c.h.b16 %v356
      %v380 = vunpack.c.l.b16 %v357
      %v381 = vunpack.c.h.b16 %v357
      %v382 = vunpack.c.l.b16 %v358
      %v383 = vunpack.c.h.b16 %v358
      %v384 = vunpack.c.l.b16 %v359
      %v385 = vunpack.c.h.b16 %v359
      %v386 = vunpack.c.l.b16 %v360
      %v387 = vunpack.c.h.b16 %v360
      %v388 = vunpack.c.l.b16 %v361
      %v389 = vunpack.c.h.b16 %v361
      %v390 = vunpack.c.l.b16 %v362
      %v391 = vunpack.c.h.b16 %v362
      %v392 = vunpack.c.l.b16 %v363
      %v393 = vpack.c.b16 %v374, %v374
      %v394 = vpack.c.b16 %v375, %v375
      %v395 = vpack.c.b16 %v376, %v376
      %v396 = vpack.c.b16 %v377, %v377
      %v397 = vpack.c.b16 %v378, %v378
      %v398 = vpack.c.b16 %v379, %v379
      %v399 = vpack.c.b16 %v380, %v380
      %v400 = vpack.c.b16 %v381, %v381
      %v401 = vpack.c.b16 %v382, %v382
      %v402 = vpack.c.b16 %v383, %v383
      %v403 = vpack.c.b16 %v384, %v384
      %v404 = vpack.c.b16 %v385, %v385
      %v405 = vpack.c.b16 %v386, %v386
      %v406 = vpack.c.b16 %v387, %v387
      %v407 = vpack.c.b16 %v388, %v388
      %v408 = vpack.c.b16 %v389, %v389
      %v409 = vpack.c.b16 %v390, %v390
      %v410 = vpack.c.b16 %v391, %v391
      %v411 = vpack.c.b16 %v392, %v392
      %431 = vst [vmem:[#allocation3] sm:$0xf] %v393
      %432 = vst [vmem:[#allocation3 + $0x4] sm:$0xf] %v394
      %433 = vst [vmem:[#allocation3 + $0x8] sm:$0xf] %v395
      %434 = vst [vmem:[#allocation3 + $0xc] sm:$0xf] %v396
      %435 = vst [vmem:[#allocation3 + $0x10] sm:$0xf] %v397
      %436 = vst [vmem:[#allocation3 + $0x14] sm:$0xf] %v398
      %437 = vst [vmem:[#allocation3 + $0x18] sm:$0xf] %v399
      %438 = vst [vmem:[#allocation3 + $0x1c] sm:$0xf] %v400
      %439 = vst [vmem:[#allocation3 + $0x20] sm:$0xf] %v401
      %440 = vst [vmem:[#allocation3 + $0x24] sm:$0xf] %v402
      %441 = vst [vmem:[#allocation3 + $0x28] sm:$0xf] %v403
      %442 = vst [vmem:[#allocation3 + $0x2c] sm:$0xf] %v404
      %443 = vst [vmem:[#allocation3 + $0x30] sm:$0xf] %v405
      %444 = vst [vmem:[#allocation3 + $0x34] sm:$0xf] %v406
      %445 = vst [vmem:[#allocation3 + $0x38] sm:$0xf] %v407
      %446 = vst [vmem:[#allocation3 + $0x3c] sm:$0xf] %v408
      %447 = vst [vmem:[#allocation3 + $0x40] sm:$0xf] %v409
      %448 = vst [vmem:[#allocation3 + $0x44] sm:$0xf] %v410
      %449 = vst [vmem:[#allocation3 + $0x48] sm:$0xf] %v411
      %450 = vst [vmem:[#allocation2] sm:$0xff] 0.0
      %451 = vst [vmem:[#allocation2 + $0x8] sm:$0xff] 0.0
      %452 = vst [vmem:[#allocation2 + $0x10] sm:$0xff] 0.0
      %453 = vst [vmem:[#allocation2 + $0x18] sm:$0xff] 0.0
      %454 = vst [vmem:[#allocation2 + $0x20] sm:$0xff] 0.0
      %455 = vst [vmem:[#allocation2 + $0x28] sm:$0xff] 0.0
      %456 = vst [vmem:[#allocation2 + $0x30] sm:$0xff] 0.0
      %457 = vst [vmem:[#allocation2 + $0x38] sm:$0xff] 0.0
      %458 = vst [vmem:[#allocation2 + $0x40] sm:$0xff] 0.0
      %459 = vst [vmem:[#allocation2 + $0x48] sm:$0xff] 0.0
      %460 = vst [vmem:[#allocation2 + $0x50] sm:$0xff] 0.0
      %461 = vst [vmem:[#allocation2 + $0x58] sm:$0xff] 0.0
      %462 = vst [vmem:[#allocation2 + $0x60] sm:$0xff] 0.0
      %463 = vst [vmem:[#allocation2 + $0x68] sm:$0xff] 0.0
      %464 = vst [vmem:[#allocation2 + $0x70] sm:$0xff] 0.0
      %465 = vst [vmem:[#allocation2 + $0x78] sm:$0xff] 0.0
      %466 = vst [vmem:[#allocation2 + $0x80] sm:$0xff] 0.0
      %467 = vst [vmem:[#allocation2 + $0x88] sm:$0xff] 0.0
      %468 = vst [vmem:[#allocation2 + $0x90] sm:$0xff] 0.0
    $region45: #{tpu_custom_call.1} parent=1 // pred_fallthru
      _
    %v469 = vld [vmem:[#allocation3] sm:$0xf]
    %v470 = vld [vmem:[#allocation3 + $0x4] sm:$0xf]
    %v471 = vld [vmem:[#allocation3 + $0x8] sm:$0xf]
    %v472 = vld [vmem:[#allocation3 + $0xc] sm:$0xf]
    %v473 = vld [vmem:[#allocation3 + $0x10] sm:$0xf]
    %v474 = vld [vmem:[#allocation3 + $0x14] sm:$0xf]
    %v475 = vld [vmem:[#allocation3 + $0x18] sm:$0xf]
    %v476 = vld [vmem:[#allocation3 + $0x1c] sm:$0xf]
    %v477 = vld [vmem:[#allocation3 + $0x20] sm:$0xf]
    %v478 = vld [vmem:[#allocation3 + $0x24] sm:$0xf]
    %v479 = vld [vmem:[#allocation3 + $0x28] sm:$0xf]
    %v480 = vld [vmem:[#allocation3 + $0x2c] sm:$0xf]
    %v481 = vld [vmem:[#allocation3 + $0x30] sm:$0xf]
    %v482 = vld [vmem:[#allocation3 + $0x34] sm:$0xf]
    %v483 = vld [vmem:[#allocation3 + $0x38] sm:$0xf]
    %v484 = vld [vmem:[#allocation3 + $0x3c] sm:$0xf]
    %v485 = vld [vmem:[#allocation3 + $0x40] sm:$0xf]
    %v486 = vld [vmem:[#allocation3 + $0x44] sm:$0xf]
    %v487 = vld [vmem:[#allocation3 + $0x48] sm:$0xf]
    %v488 = vld [vmem:[#allocation7] sm:$0xff]
    %v489 = vld [vmem:[#allocation7 + $0x8] sm:$0xff]
    %v490 = vld [vmem:[#allocation7 + $0x10] sm:$0xff]
    %v491 = vld [vmem:[#allocation7 + $0x18] sm:$0xff]
    %v492 = vld [vmem:[#allocation7 + $0x20] sm:$0xff]
    %v493 = vld [vmem:[#allocation7 + $0x28] sm:$0xff]
    %v494 = vld [vmem:[#allocation7 + $0x30] sm:$0xff]
    %v495 = vld [vmem:[#allocation7 + $0x38] sm:$0xff]
    %v496 = vld [vmem:[#allocation7 + $0x40] sm:$0xff]
    %v497 = vld [vmem:[#allocation7 + $0x48] sm:$0xff]
    %v498 = vld [vmem:[#allocation7 + $0x50] sm:$0xff]
    %v499 = vld [vmem:[#allocation7 + $0x58] sm:$0xff]
    %v500 = vld [vmem:[#allocation7 + $0x60] sm:$0xff]
    %v501 = vld [vmem:[#allocation7 + $0x68] sm:$0xff]
    %v502 = vld [vmem:[#allocation7 + $0x70] sm:$0xff]
    %v503 = vld [vmem:[#allocation7 + $0x78] sm:$0xff]
    %v504 = vld [vmem:[#allocation7 + $0x80] sm:$0xff]
    %v505 = vld [vmem:[#allocation7 + $0x88] sm:$0xff]
    %v506 = vld [vmem:[#allocation7 + $0x90] sm:$0xff]
    %v507 = vld [vmem:[#allocation7 + $0x98] sm:$0xff]
    %v508 = vld [vmem:[#allocation7 + $0xa0] sm:$0xff]
    %v509 = vld [vmem:[#allocation7 + $0xa8] sm:$0xff]
    %v510 = vld [vmem:[#allocation7 + $0xb0] sm:$0xff]
    %v511 = vld [vmem:[#allocation7 + $0xb8] sm:$0xff]
    %v512 = vld [vmem:[#allocation7 + $0xc0] sm:$0xff]
    %v513 = vld [vmem:[#allocation7 + $0xc8] sm:$0xff]
    %v514 = vld [vmem:[#allocation7 + $0xd0] sm:$0xff]
    %v515 = vld [vmem:[#allocation7 + $0xd8] sm:$0xff]
    %v516 = vld [vmem:[#allocation7 + $0xe0] sm:$0xff]
    %v517 = vld [vmem:[#allocation7 + $0xe8] sm:$0xff]
    %v518 = vld [vmem:[#allocation7 + $0xf0] sm:$0xff]
    %v519 = vld [vmem:[#allocation7 + $0xf8] sm:$0xff]
    %v520 = vld [vmem:[%s4] sm:$0xf]
    %v522 = vlaneseq
    %v523 = vshrl.u32 %v522, 7
    %v524 = vsub.s32 0, %v523
    %v525 = vrot.slane %v520, %v524
    %v526 = vlaneseq
    %v527 = vshrl.u32 %v526, 7
    %v528 = vsub.s32 1, %v527
    %v529 = vrot.slane %v520, %v528
    %v530 = vlaneseq
    %v531 = vshrl.u32 %v530, 7
    %v532 = vsub.s32 2, %v531
    %v533 = vrot.slane %v520, %v532
    %v534 = vlaneseq
    %v535 = vshrl.u32 %v534, 7
    %v536 = vsub.s32 3, %v535
    %v537 = vrot.slane %v520, %v536
    %v561 = vunpack.c.l.b16 %v469
    %v562 = vunpack.c.l.b16 %v470
    %v563 = vunpack.c.l.b16 %v471
    %v564 = vunpack.c.l.b16 %v472
    %v565 = vunpack.c.l.b16 %v473
    %v566 = vunpack.c.l.b16 %v474
    %v567 = vunpack.c.l.b16 %v475
    %v568 = vunpack.c.l.b16 %v476
    %v569 = vunpack.c.l.b16 %v477
    %v570 = vunpack.c.l.b16 %v478
    %v571 = vunpack.c.l.b16 %v479
    %v572 = vunpack.c.l.b16 %v480
    %v573 = vunpack.c.l.b16 %v481
    %v574 = vunpack.c.l.b16 %v482
    %v575 = vunpack.c.l.b16 %v483
    %v576 = vunpack.c.l.b16 %v484
    %v577 = vunpack.c.l.b16 %v485
    %v578 = vunpack.c.l.b16 %v486
    %v579 = vunpack.c.l.b16 %v487
    %v580 = vpack.c.b16 %v562, %v561
    %v581 = vpack.c.b16 %v564, %v563
    %v582 = vpack.c.b16 %v566, %v565
    %v583 = vpack.c.b16 %v568, %v567
    %v584 = vpack.c.b16 %v570, %v569
    %v585 = vpack.c.b16 %v572, %v571
    %v586 = vpack.c.b16 %v574, %v573
    %v587 = vpack.c.b16 %v576, %v575
    %v588 = vpack.c.b16 %v578, %v577
    %v589 = vpack.c.b16 %v579, %v579
    %v632 = vunpack.c.l.b16 %v488
    %v633 = vunpack.c.h.b16 %v488
    %v634 = vunpack.c.l.b16 %v489
    %v635 = vunpack.c.h.b16 %v489
    %v636 = vunpack.c.l.b16 %v490
    %v637 = vunpack.c.h.b16 %v490
    %v638 = vunpack.c.l.b16 %v491
    %v639 = vunpack.c.h.b16 %v491
    %v640 = vunpack.c.l.b16 %v492
    %v641 = vunpack.c.h.b16 %v492
    %v642 = vunpack.c.l.b16 %v493
    %v643 = vunpack.c.h.b16 %v493
    %v644 = vunpack.c.l.b16 %v494
    %v645 = vunpack.c.h.b16 %v494
    %v646 = vunpack.c.l.b16 %v495
    %v647 = vunpack.c.h.b16 %v495
    %v648 = vunpack.c.l.b16 %v496
    %v649 = vunpack.c.h.b16 %v496
    %v650 = vunpack.c.l.b16 %v497
    %v651 = vunpack.c.h.b16 %v497
    %v652 = vunpack.c.l.b16 %v498
    %v653 = vunpack.c.h.b16 %v498
    %v654 = vunpack.c.l.b16 %v499
    %v655 = vunpack.c.h.b16 %v499
    %v656 = vunpack.c.l.b16 %v500
    %v657 = vunpack.c.h.b16 %v500
    %v658 = vunpack.c.l.b16 %v501
    %v659 = vunpack.c.h.b16 %v501
    %v660 = vunpack.c.l.b16 %v502
    %v661 = vunpack.c.h.b16 %v502
    %v662 = vunpack.c.l.b16 %v503
    %v663 = vunpack.c.h.b16 %v503
    %v664 = vunpack.c.l.b16 %v504
    %v665 = vunpack.c.h.b16 %v504
    %v666 = vunpack.c.l.b16 %v505
    %v667 = vunpack.c.h.b16 %v505
    %v668 = vunpack.c.l.b16 %v506
    %v669 = vunpack.c.h.b16 %v506
    %v670 = vunpack.c.l.b16 %v507
    %v671 = vunpack.c.h.b16 %v507
    %v672 = vunpack.c.l.b16 %v508
    %v673 = vunpack.c.h.b16 %v508
    %v674 = vunpack.c.l.b16 %v509
    %v675 = vunpack.c.h.b16 %v509
    %v676 = vunpack.c.l.b16 %v510
    %v677 = vunpack.c.h.b16 %v510
    %v678 = vunpack.c.l.b16 %v511
    %v679 = vunpack.c.h.b16 %v511
    %v680 = vunpack.c.l.b16 %v512
    %v681 = vunpack.c.h.b16 %v512
    %v682 = vunpack.c.l.b16 %v513
    %v683 = vunpack.c.h.b16 %v513
    %v684 = vunpack.c.l.b16 %v514
    %v685 = vunpack.c.h.b16 %v514
    %v686 = vunpack.c.l.b16 %v515
    %v687 = vunpack.c.h.b16 %v515
    %v688 = vunpack.c.l.b16 %v516
    %v689 = vunpack.c.h.b16 %v516
    %v690 = vunpack.c.l.b16 %v517
    %v691 = vunpack.c.h.b16 %v517
    %v692 = vunpack.c.l.b16 %v518
    %v693 = vunpack.c.h.b16 %v518
    %v694 = vunpack.c.l.b16 %v519
    %v695 = vunpack.c.h.b16 %v519
    %v696 = vpack.c.b16 %v636, %v632
    %v697 = vpack.c.b16 %v637, %v633
    %v698 = vpack.c.b16 %v638, %v634
    %v699 = vpack.c.b16 %v639, %v635
    %v700 = vpack.c.b16 %v644, %v640
    %v701 = vpack.c.b16 %v645, %v641
    %v702 = vpack.c.b16 %v646, %v642
    %v703 = vpack.c.b16 %v647, %v643
    %v704 = vpack.c.b16 %v652, %v648
    %v705 = vpack.c.b16 %v653, %v649
    %v706 = vpack.c.b16 %v654, %v650
    %v707 = vpack.c.b16 %v655, %v651
    %v708 = vpack.c.b16 %v660, %v656
    %v709 = vpack.c.b16 %v661, %v657
    %v710 = vpack.c.b16 %v662, %v658
    %v711 = vpack.c.b16 %v663, %v659
    %v712 = vpack.c.b16 %v668, %v664
    %v713 = vpack.c.b16 %v669, %v665
    %v714 = vpack.c.b16 %v670, %v666
    %v715 = vpack.c.b16 %v671, %v667
    %v716 = vpack.c.b16 %v676, %v672
    %v717 = vpack.c.b16 %v677, %v673
    %v718 = vpack.c.b16 %v678, %v674
    %v719 = vpack.c.b16 %v679, %v675
    %v720 = vpack.c.b16 %v684, %v680
    %v721 = vpack.c.b16 %v685, %v681
    %v722 = vpack.c.b16 %v686, %v682
    %v723 = vpack.c.b16 %v687, %v683
    %v724 = vpack.c.b16 %v692, %v688
    %v725 = vpack.c.b16 %v693, %v689
    %v726 = vpack.c.b16 %v694, %v690
    %v727 = vpack.c.b16 %v695, %v691
    %760 = vmatprep.subr.bf16.mxu0 %v725
    %761 = vmatpush1.bf16.msra.mxu0 %v724
    %762 = vmatprep.subr.bf16.mxu0 %v721
    %763 = vmatpush1.bf16.msra.mxu0 %v720
    %764 = vmatprep.subr.bf16.mxu0 %v717
    %765 = vmatpush1.bf16.msra.mxu0 %v716
    %766 = vmatprep.subr.bf16.mxu0 %v713
    %767 = vmatpush1.bf16.msra.mxu0 %v712
    %768 = vmatprep.subr.bf16.mxu0 %v709
    %769 = vmatpush1.bf16.msra.mxu0 %v708
    %770 = vmatprep.subr.bf16.mxu0 %v705
    %771 = vmatpush1.bf16.msra.mxu0 %v704
    %772 = vmatprep.subr.bf16.mxu0 %v701
    %773 = vmatpush1.bf16.msra.mxu0 %v700
    %774 = vmatprep.subr.bf16.mxu0 %v697
    %775 = vmatpush1.bf16.msra.mxu0 %v696
    %776 = vmatprep.subr.bf16.mxu0 0
    %777 = vmatpush2.bf16.msra.mxu0 0
    %778 = vmatprep.subr.bf16.mxu0 0
    %779 = vmatpush2.bf16.msra.mxu0 0
    %780 = vmatprep.subr.bf16.mxu0 0
    %781 = vmatpush2.bf16.msra.mxu0 0
    %782 = vmatprep.subr.bf16.mxu0 0
    %783 = vmatpush2.bf16.msra.mxu0 0
    %784 = vmatprep.subr.bf16.mxu0 0
    %785 = vmatpush2.bf16.msra.mxu0 0
    %786 = vmatprep.subr.bf16.mxu0 0
    %787 = vmatpush2.bf16.msra.mxu0 0
    %788 = vmatprep.subr.bf16.mxu0 0
    %789 = vmatpush2.bf16.msra.mxu0 0
    %790 = vmatprep.subr.bf16.mxu0 0
    %791 = vmatpush2.bf16.msra.mxu0 0
    %792 = vmatprep.mubr.bf16.mxu0 0
    %793 = vmatmul.mubr.bf16.gmra.mxu0 %v580
    %v794 = vpop.f32.mrf.mxu0
    %v795 = vadd.f32 %v525, %v794
    %v796 = vpop.f32.mrf.mxu0
    %v797 = vadd.f32 %v529, %v796
    %v798 = vpop.f32.mrf.mxu0
    %v799 = vadd.f32 %v525, %v798
    %v800 = vpop.f32.mrf.mxu0
    %v801 = vadd.f32 %v529, %v800
    %802 = vmatprep.mubr.bf16.mxu0 0
    %803 = vmatmul.mubr.bf16.gmra.mxu0 %v581
    %v804 = vpop.f32.mrf.mxu0
    %v805 = vadd.f32 %v525, %v804
    %v806 = vpop.f32.mrf.mxu0
    %v807 = vadd.f32 %v529, %v806
    %v808 = vpop.f32.mrf.mxu0
    %v809 = vadd.f32 %v525, %v808
    %v810 = vpop.f32.mrf.mxu0
    %v811 = vadd.f32 %v529, %v810
    %812 = vmatprep.mubr.bf16.mxu0 0
    %813 = vmatmul.mubr.bf16.gmra.mxu0 %v582
    %v814 = vpop.f32.mrf.mxu0
    %v815 = vadd.f32 %v525, %v814
    %v816 = vpop.f32.mrf.mxu0
    %v817 = vadd.f32 %v529, %v816
    %v818 = vpop.f32.mrf.mxu0
    %v819 = vadd.f32 %v525, %v818
    %v820 = vpop.f32.mrf.mxu0
    %v821 = vadd.f32 %v529, %v820
    %822 = vmatprep.mubr.bf16.mxu0 0
    %823 = vmatmul.mubr.bf16.gmra.mxu0 %v583
    %v824 = vpop.f32.mrf.mxu0
    %v825 = vadd.f32 %v525, %v824
    %v826 = vpop.f32.mrf.mxu0
    %v827 = vadd.f32 %v529, %v826
    %v828 = vpop.f32.mrf.mxu0
    %v829 = vadd.f32 %v525, %v828
    %v830 = vpop.f32.mrf.mxu0
    %v831 = vadd.f32 %v529, %v830
    %832 = vmatprep.mubr.bf16.mxu0 0
    %833 = vmatmul.mubr.bf16.gmra.mxu0 %v584
    %v834 = vpop.f32.mrf.mxu0
    %v835 = vadd.f32 %v525, %v834
    %v836 = vpop.f32.mrf.mxu0
    %v837 = vadd.f32 %v529, %v836
    %v838 = vpop.f32.mrf.mxu0
    %v839 = vadd.f32 %v525, %v838
    %v840 = vpop.f32.mrf.mxu0
    %v841 = vadd.f32 %v529, %v840
    %842 = vmatprep.mubr.bf16.mxu0 0
    %843 = vmatmul.mubr.bf16.gmra.mxu0 %v585
    %v844 = vpop.f32.mrf.mxu0
    %v845 = vadd.f32 %v525, %v844
    %v846 = vpop.f32.mrf.mxu0
    %v847 = vadd.f32 %v529, %v846
    %v848 = vpop.f32.mrf.mxu0
    %v849 = vadd.f32 %v525, %v848
    %v850 = vpop.f32.mrf.mxu0
    %v851 = vadd.f32 %v529, %v850
    %852 = vmatprep.mubr.bf16.mxu0 0
    %853 = vmatmul.mubr.bf16.gmra.mxu0 %v586
    %v854 = vpop.f32.mrf.mxu0
    %v855 = vadd.f32 %v525, %v854
    %v856 = vpop.f32.mrf.mxu0
    %v857 = vadd.f32 %v529, %v856
    %v858 = vpop.f32.mrf.mxu0
    %v859 = vadd.f32 %v525, %v858
    %v860 = vpop.f32.mrf.mxu0
    %v861 = vadd.f32 %v529, %v860
    %862 = vmatprep.mubr.bf16.mxu0 0
    %863 = vmatmul.mubr.bf16.gmra.mxu0 %v587
    %v864 = vpop.f32.mrf.mxu0
    %v865 = vadd.f32 %v525, %v864
    %v866 = vpop.f32.mrf.mxu0
    %v867 = vadd.f32 %v529, %v866
    %v868 = vpop.f32.mrf.mxu0
    %v869 = vadd.f32 %v525, %v868
    %v870 = vpop.f32.mrf.mxu0
    %v871 = vadd.f32 %v529, %v870
    %872 = vmatprep.mubr.bf16.mxu0 0
    %873 = vmatmul.mubr.bf16.gmra.mxu0 %v588
    %v874 = vpop.f32.mrf.mxu0
    %v875 = vadd.f32 %v525, %v874
    %v876 = vpop.f32.mrf.mxu0
    %v877 = vadd.f32 %v529, %v876
    %v878 = vpop.f32.mrf.mxu0
    %v879 = vadd.f32 %v525, %v878
    %v880 = vpop.f32.mrf.mxu0
    %v881 = vadd.f32 %v529, %v880
    %882 = vmatprep.mubr.bf16.mxu0 0
    %883 = vmatmul.mubr.bf16.gmra.mxu0 %v589
    %v884 = vpop.f32.mrf.mxu0
    %v885 = vadd.f32 %v525, %v884
    %v886 = vpop.f32.mrf.mxu0
    %v887 = vadd.f32 %v529, %v886
    %v888 = vpop.f32.mrf.mxu0
    %v889 = vpop.f32.mrf.mxu0
    %890 = vdwg.mxu0
    %891 = vmatprep.subr.bf16.mxu0 %v727
    %892 = vmatpush1.bf16.msra.mxu0 %v726
    %893 = vmatprep.subr.bf16.mxu0 %v723
    %894 = vmatpush1.bf16.msra.mxu0 %v722
    %895 = vmatprep.subr.bf16.mxu0 %v719
    %896 = vmatpush1.bf16.msra.mxu0 %v718
    %897 = vmatprep.subr.bf16.mxu0 %v715
    %898 = vmatpush1.bf16.msra.mxu0 %v714
    %899 = vmatprep.subr.bf16.mxu0 %v711
    %900 = vmatpush1.bf16.msra.mxu0 %v710
    %901 = vmatprep.subr.bf16.mxu0 %v707
    %902 = vmatpush1.bf16.msra.mxu0 %v706
    %903 = vmatprep.subr.bf16.mxu0 %v703
    %904 = vmatpush1.bf16.msra.mxu0 %v702
    %905 = vmatprep.subr.bf16.mxu0 %v699
    %906 = vmatpush1.bf16.msra.mxu0 %v698
    %907 = vmatprep.subr.bf16.mxu0 0
    %908 = vmatpush2.bf16.msra.mxu0 0
    %909 = vmatprep.subr.bf16.mxu0 0
    %910 = vmatpush2.bf16.msra.mxu0 0
    %911 = vmatprep.subr.bf16.mxu0 0
    %912 = vmatpush2.bf16.msra.mxu0 0
    %913 = vmatprep.subr.bf16.mxu0 0
    %914 = vmatpush2.bf16.msra.mxu0 0
    %915 = vmatprep.subr.bf16.mxu0 0
    %916 = vmatpush2.bf16.msra.mxu0 0
    %917 = vmatprep.subr.bf16.mxu0 0
    %918 = vmatpush2.bf16.msra.mxu0 0
    %919 = vmatprep.subr.bf16.mxu0 0
    %920 = vmatpush2.bf16.msra.mxu0 0
    %921 = vmatprep.subr.bf16.mxu0 0
    %922 = vmatpush2.bf16.msra.mxu0 0
    %923 = vmatprep.mubr.bf16.mxu0 0
    %924 = vmatmul.mubr.bf16.gmra.mxu0 %v580
    %v925 = vpop.f32.mrf.mxu0
    %v926 = vadd.f32 %v533, %v925
    %v927 = vpop.f32.mrf.mxu0
    %v928 = vadd.f32 %v537, %v927
    %v929 = vpop.f32.mrf.mxu0
    %v930 = vadd.f32 %v533, %v929
    %v931 = vpop.f32.mrf.mxu0
    %v932 = vadd.f32 %v537, %v931
    %933 = vmatprep.mubr.bf16.mxu0 0
    %934 = vmatmul.mubr.bf16.gmra.mxu0 %v581
    %v935 = vpop.f32.mrf.mxu0
    %v936 = vadd.f32 %v533, %v935
    %v937 = vpop.f32.mrf.mxu0
    %v938 = vadd.f32 %v537, %v937
    %v939 = vpop.f32.mrf.mxu0
    %v940 = vadd.f32 %v533, %v939
    %v941 = vpop.f32.mrf.mxu0
    %v942 = vadd.f32 %v537, %v941
    %943 = vmatprep.mubr.bf16.mxu0 0
    %944 = vmatmul.mubr.bf16.gmra.mxu0 %v582
    %v945 = vpop.f32.mrf.mxu0
    %v946 = vadd.f32 %v533, %v945
    %v947 = vpop.f32.mrf.mxu0
    %v948 = vadd.f32 %v537, %v947
    %v949 = vpop.f32.mrf.mxu0
    %v950 = vadd.f32 %v533, %v949
    %v951 = vpop.f32.mrf.mxu0
    %v952 = vadd.f32 %v537, %v951
    %953 = vmatprep.mubr.bf16.mxu0 0
    %954 = vmatmul.mubr.bf16.gmra.mxu0 %v583
    %v955 = vpop.f32.mrf.mxu0
    %v956 = vadd.f32 %v533, %v955
    %v957 = vpop.f32.mrf.mxu0
    %v958 = vadd.f32 %v537, %v957
    %v959 = vpop.f32.mrf.mxu0
    %v960 = vadd.f32 %v533, %v959
    %v961 = vpop.f32.mrf.mxu0
    %v962 = vadd.f32 %v537, %v961
    %963 = vmatprep.mubr.bf16.mxu0 0
    %964 = vmatmul.mubr.bf16.gmra.mxu0 %v584
    %v965 = vpop.f32.mrf.mxu0
    %v966 = vadd.f32 %v533, %v965
    %v967 = vpop.f32.mrf.mxu0
    %v968 = vadd.f32 %v537, %v967
    %v969 = vpop.f32.mrf.mxu0
    %v970 = vadd.f32 %v533, %v969
    %v971 = vpop.f32.mrf.mxu0
    %v972 = vadd.f32 %v537, %v971
    %973 = vmatprep.mubr.bf16.mxu0 0
    %974 = vmatmul.mubr.bf16.gmra.mxu0 %v585
    %v975 = vpop.f32.mrf.mxu0
    %v976 = vadd.f32 %v533, %v975
    %v977 = vpop.f32.mrf.mxu0
    %v978 = vadd.f32 %v537, %v977
    %v979 = vpop.f32.mrf.mxu0
    %v980 = vadd.f32 %v533, %v979
    %v981 = vpop.f32.mrf.mxu0
    %v982 = vadd.f32 %v537, %v981
    %983 = vmatprep.mubr.bf16.mxu0 0
    %984 = vmatmul.mubr.bf16.gmra.mxu0 %v586
    %v985 = vpop.f32.mrf.mxu0
    %v986 = vadd.f32 %v533, %v985
    %v987 = vpop.f32.mrf.mxu0
    %v988 = vadd.f32 %v537, %v987
    %v989 = vpop.f32.mrf.mxu0
    %v990 = vadd.f32 %v533, %v989
    %v991 = vpop.f32.mrf.mxu0
    %v992 = vadd.f32 %v537, %v991
    %993 = vmatprep.mubr.bf16.mxu0 0
    %994 = vmatmul.mubr.bf16.gmra.mxu0 %v587
    %v995 = vpop.f32.mrf.mxu0
    %v996 = vadd.f32 %v533, %v995
    %v997 = vpop.f32.mrf.mxu0
    %v998 = vadd.f32 %v537, %v997
    %v999 = vpop.f32.mrf.mxu0
    %v1000 = vadd.f32 %v533, %v999
    %v1001 = vpop.f32.mrf.mxu0
    %v1002 = vadd.f32 %v537, %v1001
    %1003 = vmatprep.mubr.bf16.mxu0 0
    %1004 = vmatmul.mubr.bf16.gmra.mxu0 %v588
    %v1005 = vpop.f32.mrf.mxu0
    %v1006 = vadd.f32 %v533, %v1005
    %v1007 = vpop.f32.mrf.mxu0
    %v1008 = vadd.f32 %v537, %v1007
    %v1009 = vpop.f32.mrf.mxu0
    %v1010 = vadd.f32 %v533, %v1009
    %v1011 = vpop.f32.mrf.mxu0
    %v1012 = vadd.f32 %v537, %v1011
    %1013 = vmatprep.mubr.bf16.mxu0 0
    %1014 = vmatmul.mubr.bf16.gmra.mxu0 %v589
    %v1015 = vpop.f32.mrf.mxu0
    %v1016 = vadd.f32 %v533, %v1015
    %v1017 = vpop.f32.mrf.mxu0
    %v1018 = vadd.f32 %v537, %v1017
    %v1019 = vpop.f32.mrf.mxu0
    %v1020 = vpop.f32.mrf.mxu0
    %1021 = vdwg.mxu0
    %v1022 = vmul.f32 %v795, 0.5
    %v1023 = vmul.f32 %v797, 0.5
    %v1024 = vmul.f32 %v926, 0.5
    %v1025 = vmul.f32 %v928, 0.5
    %v1026 = vmul.f32 %v799, 0.5
    %v1027 = vmul.f32 %v801, 0.5
    %v1028 = vmul.f32 %v930, 0.5
    %v1029 = vmul.f32 %v932, 0.5
    %v1030 = vmul.f32 %v805, 0.5
    %v1031 = vmul.f32 %v807, 0.5
    %v1032 = vmul.f32 %v936, 0.5
    %v1033 = vmul.f32 %v938, 0.5
    %v1034 = vmul.f32 %v809, 0.5
    %v1035 = vmul.f32 %v811, 0.5
    %v1036 = vmul.f32 %v940, 0.5
    %v1037 = vmul.f32 %v942, 0.5
    %v1038 = vmul.f32 %v815, 0.5
    %v1039 = vmul.f32 %v817, 0.5
    %v1040 = vmul.f32 %v946, 0.5
    %v1041 = vmul.f32 %v948, 0.5
    %v1042 = vmul.f32 %v819, 0.5
    %v1043 = vmul.f32 %v821, 0.5
    %v1044 = vmul.f32 %v950, 0.5
    %v1045 = vmul.f32 %v952, 0.5
    %v1046 = vmul.f32 %v825, 0.5
    %v1047 = vmul.f32 %v827, 0.5
    %v1048 = vmul.f32 %v956, 0.5
    %v1049 = vmul.f32 %v958, 0.5
    %v1050 = vmul.f32 %v829, 0.5
    %v1051 = vmul.f32 %v831, 0.5
    %v1052 = vmul.f32 %v960, 0.5
    %v1053 = vmul.f32 %v962, 0.5
    %v1054 = vmul.f32 %v835, 0.5
    %v1055 = vmul.f32 %v837, 0.5
    %v1056 = vmul.f32 %v966, 0.5
    %v1057 = vmul.f32 %v968, 0.5
    %v1058 = vmul.f32 %v839, 0.5
    %v1059 = vmul.f32 %v841, 0.5
    %v1060 = vmul.f32 %v970, 0.5
    %v1061 = vmul.f32 %v972, 0.5
    %v1062 = vmul.f32 %v845, 0.5
    %v1063 = vmul.f32 %v847, 0.5
    %v1064 = vmul.f32 %v976, 0.5
    %v1065 = vmul.f32 %v978, 0.5
    %v1066 = vmul.f32 %v849, 0.5
    %v1067 = vmul.f32 %v851, 0.5
    %v1068 = vmul.f32 %v980, 0.5
    %v1069 = vmul.f32 %v982, 0.5
    %v1070 = vmul.f32 %v855, 0.5
    %v1071 = vmul.f32 %v857, 0.5
    %v1072 = vmul.f32 %v986, 0.5
    %v1073 = vmul.f32 %v988, 0.5
    %v1074 = vmul.f32 %v859, 0.5
    %v1075 = vmul.f32 %v861, 0.5
    %v1076 = vmul.f32 %v990, 0.5
    %v1077 = vmul.f32 %v992, 0.5
    %v1078 = vmul.f32 %v865, 0.5
    %v1079 = vmul.f32 %v867, 0.5
    %v1080 = vmul.f32 %v996, 0.5
    %v1081 = vmul.f32 %v998, 0.5
    %v1082 = vmul.f32 %v869, 0.5
    %v1083 = vmul.f32 %v871, 0.5
    %v1084 = vmul.f32 %v1000, 0.5
    %v1085 = vmul.f32 %v1002, 0.5
    %v1086 = vmul.f32 %v875, 0.5
    %v1087 = vmul.f32 %v877, 0.5
    %v1088 = vmul.f32 %v1006, 0.5
    %v1089 = vmul.f32 %v1008, 0.5
    %v1090 = vmul.f32 %v879, 0.5
    %v1091 = vmul.f32 %v881, 0.5
    %v1092 = vmul.f32 %v1010, 0.5
    %v1093 = vmul.f32 %v1012, 0.5
    %v1094 = vmul.f32 %v885, 0.5
    %v1095 = vmul.f32 %v887, 0.5
    %v1096 = vmul.f32 %v1016, 0.5
    %v1097 = vmul.f32 %v1018, 0.5
    %v1098 = vmul.f32 %v795, 0.70710677
    %v1099 = vmul.f32 %v797, 0.70710677
    %v1100 = vmul.f32 %v926, 0.70710677
    %v1101 = vmul.f32 %v928, 0.70710677
    %v1102 = vmul.f32 %v799, 0.70710677
    %v1103 = vmul.f32 %v801, 0.70710677
    %v1104 = vmul.f32 %v930, 0.70710677
    %v1105 = vmul.f32 %v932, 0.70710677
    %v1106 = vmul.f32 %v805, 0.70710677
    %v1107 = vmul.f32 %v807, 0.70710677
    %v1108 = vmul.f32 %v936, 0.70710677
    %v1109 = vmul.f32 %v938, 0.70710677
    %v1110 = vmul.f32 %v809, 0.70710677
    %v1111 = vmul.f32 %v811, 0.70710677
    %v1112 = vmul.f32 %v940, 0.70710677
    %v1113 = vmul.f32 %v942, 0.70710677
    %v1114 = vmul.f32 %v815, 0.70710677
    %v1115 = vmul.f32 %v817, 0.70710677
    %v1116 = vmul.f32 %v946, 0.70710677
    %v1117 = vmul.f32 %v948, 0.70710677
    %v1118 = vmul.f32 %v819, 0.70710677
    %v1119 = vmul.f32 %v821, 0.70710677
    %v1120 = vmul.f32 %v950, 0.70710677
    %v1121 = vmul.f32 %v952, 0.70710677
    %v1122 = vmul.f32 %v825, 0.70710677
    %v1123 = vmul.f32 %v827, 0.70710677
    %v1124 = vmul.f32 %v956, 0.70710677
    %v1125 = vmul.f32 %v958, 0.70710677
    %v1126 = vmul.f32 %v829, 0.70710677
    %v1127 = vmul.f32 %v831, 0.70710677
    %v1128 = vmul.f32 %v960, 0.70710677
    %v1129 = vmul.f32 %v962, 0.70710677
    %v1130 = vmul.f32 %v835, 0.70710677
    %v1131 = vmul.f32 %v837, 0.70710677
    %v1132 = vmul.f32 %v966, 0.70710677
    %v1133 = vmul.f32 %v968, 0.70710677
    %v1134 = vmul.f32 %v839, 0.70710677
    %v1135 = vmul.f32 %v841, 0.70710677
    %v1136 = vmul.f32 %v970, 0.70710677
    %v1137 = vmul.f32 %v972, 0.70710677
    %v1138 = vmul.f32 %v845, 0.70710677
    %v1139 = vmul.f32 %v847, 0.70710677
    %v1140 = vmul.f32 %v976, 0.70710677
    %v1141 = vmul.f32 %v978, 0.70710677
    %v1142 = vmul.f32 %v849, 0.70710677
    %v1143 = vmul.f32 %v851, 0.70710677
    %v1144 = vmul.f32 %v980, 0.70710677
    %v1145 = vmul.f32 %v982, 0.70710677
    %v1146 = vmul.f32 %v855, 0.70710677
    %v1147 = vmul.f32 %v857, 0.70710677
    %v1148 = vmul.f32 %v986, 0.70710677
    %v1149 = vmul.f32 %v988, 0.70710677
    %v1150 = vmul.f32 %v859, 0.70710677
    %v1151 = vmul.f32 %v861, 0.70710677
    %v1152 = vmul.f32 %v990, 0.70710677
    %v1153 = vmul.f32 %v992, 0.70710677
    %v1154 = vmul.f32 %v865, 0.70710677
    %v1155 = vmul.f32 %v867, 0.70710677
    %v1156 = vmul.f32 %v996, 0.70710677
    %v1157 = vmul.f32 %v998, 0.70710677
    %v1158 = vmul.f32 %v869, 0.70710677
    %v1159 = vmul.f32 %v871, 0.70710677
    %v1160 = vmul.f32 %v1000, 0.70710677
    %v1161 = vmul.f32 %v1002, 0.70710677
    %v1162 = vmul.f32 %v875, 0.70710677
    %v1163 = vmul.f32 %v877, 0.70710677
    %v1164 = vmul.f32 %v1006, 0.70710677
    %v1165 = vmul.f32 %v1008, 0.70710677
    %v1166 = vmul.f32 %v879, 0.70710677
    %v1167 = vmul.f32 %v881, 0.70710677
    %v1168 = vmul.f32 %v1010, 0.70710677
    %v1169 = vmul.f32 %v1012, 0.70710677
    %v1170 = vmul.f32 %v885, 0.70710677
    %v1171 = vmul.f32 %v887, 0.70710677
    %v1172 = vmul.f32 %v1016, 0.70710677
    %v1173 = vmul.f32 %v1018, 0.70710677
    %v1174 = verf.f32.pop %v1098
    %v1175 = verf.f32.pop %v1099
    %v1176 = verf.f32.pop %v1100
    %v1177 = verf.f32.pop %v1101
    %v1178 = verf.f32.pop %v1102
    %v1179 = verf.f32.pop %v1103
    %v1180 = verf.f32.pop %v1104
    %v1181 = verf.f32.pop %v1105
    %v1182 = verf.f32.pop %v1106
    %v1183 = verf.f32.pop %v1107
    %v1184 = verf.f32.pop %v1108
    %v1185 = verf.f32.pop %v1109
    %v1186 = verf.f32.pop %v1110
    %v1187 = verf.f32.pop %v1111
    %v1188 = verf.f32.pop %v1112
    %v1189 = verf.f32.pop %v1113
    %v1190 = verf.f32.pop %v1114
    %v1191 = verf.f32.pop %v1115
    %v1192 = verf.f32.pop %v1116
    %v1193 = verf.f32.pop %v1117
    %v1194 = verf.f32.pop %v1118
    %v1195 = verf.f32.pop %v1119
    %v1196 = verf.f32.pop %v1120
    %v1197 = verf.f32.pop %v1121
    %v1198 = verf.f32.pop %v1122
    %v1199 = verf.f32.pop %v1123
    %v1200 = verf.f32.pop %v1124
    %v1201 = verf.f32.pop %v1125
    %v1202 = verf.f32.pop %v1126
    %v1203 = verf.f32.pop %v1127
    %v1204 = verf.f32.pop %v1128
    %v1205 = verf.f32.pop %v1129
    %v1206 = verf.f32.pop %v1130
    %v1207 = verf.f32.pop %v1131
    %v1208 = verf.f32.pop %v1132
    %v1209 = verf.f32.pop %v1133
    %v1210 = verf.f32.pop %v1134
    %v1211 = verf.f32.pop %v1135
    %v1212 = verf.f32.pop %v1136
    %v1213 = verf.f32.pop %v1137
    %v1214 = verf.f32.pop %v1138
    %v1215 = verf.f32.pop %v1139
    %v1216 = verf.f32.pop %v1140
    %v1217 = verf.f32.pop %v1141
    %v1218 = verf.f32.pop %v1142
    %v1219 = verf.f32.pop %v1143
    %v1220 = verf.f32.pop %v1144
    %v1221 = verf.f32.pop %v1145
    %v1222 = verf.f32.pop %v1146
    %v1223 = verf.f32.pop %v1147
    %v1224 = verf.f32.pop %v1148
    %v1225 = verf.f32.pop %v1149
    %v1226 = verf.f32.pop %v1150
    %v1227 = verf.f32.pop %v1151
    %v1228 = verf.f32.pop %v1152
    %v1229 = verf.f32.pop %v1153
    %v1230 = verf.f32.pop %v1154
    %v1231 = verf.f32.pop %v1155
    %v1232 = verf.f32.pop %v1156
    %v1233 = verf.f32.pop %v1157
    %v1234 = verf.f32.pop %v1158
    %v1235 = verf.f32.pop %v1159
    %v1236 = verf.f32.pop %v1160
    %v1237 = verf.f32.pop %v1161
    %v1238 = verf.f32.pop %v1162
    %v1239 = verf.f32.pop %v1163
    %v1240 = verf.f32.pop %v1164
    %v1241 = verf.f32.pop %v1165
    %v1242 = verf.f32.pop %v1166
    %v1243 = verf.f32.pop %v1167
    %v1244 = verf.f32.pop %v1168
    %v1245 = verf.f32.pop %v1169
    %v1246 = verf.f32.pop %v1170
    %v1247 = verf.f32.pop %v1171
    %v1248 = verf.f32.pop %v1172
    %v1249 = verf.f32.pop %v1173
    %v1250 = vadd.f32 %v1174, 1.0
    %v1251 = vadd.f32 %v1175, 1.0
    %v1252 = vadd.f32 %v1176, 1.0
    %v1253 = vadd.f32 %v1177, 1.0
    %v1254 = vadd.f32 %v1178, 1.0
    %v1255 = vadd.f32 %v1179, 1.0
    %v1256 = vadd.f32 %v1180, 1.0
    %v1257 = vadd.f32 %v1181, 1.0
    %v1258 = vadd.f32 %v1182, 1.0
    %v1259 = vadd.f32 %v1183, 1.0
    %v1260 = vadd.f32 %v1184, 1.0
    %v1261 = vadd.f32 %v1185, 1.0
    %v1262 = vadd.f32 %v1186, 1.0
    %v1263 = vadd.f32 %v1187, 1.0
    %v1264 = vadd.f32 %v1188, 1.0
    %v1265 = vadd.f32 %v1189, 1.0
    %v1266 = vadd.f32 %v1190, 1.0
    %v1267 = vadd.f32 %v1191, 1.0
    %v1268 = vadd.f32 %v1192, 1.0
    %v1269 = vadd.f32 %v1193, 1.0
    %v1270 = vadd.f32 %v1194, 1.0
    %v1271 = vadd.f32 %v1195, 1.0
    %v1272 = vadd.f32 %v1196, 1.0
    %v1273 = vadd.f32 %v1197, 1.0
    %v1274 = vadd.f32 %v1198, 1.0
    %v1275 = vadd.f32 %v1199, 1.0
    %v1276 = vadd.f32 %v1200, 1.0
    %v1277 = vadd.f32 %v1201, 1.0
    %v1278 = vadd.f32 %v1202, 1.0
    %v1279 = vadd.f32 %v1203, 1.0
    %v1280 = vadd.f32 %v1204, 1.0
    %v1281 = vadd.f32 %v1205, 1.0
    %v1282 = vadd.f32 %v1206, 1.0
    %v1283 = vadd.f32 %v1207, 1.0
    %v1284 = vadd.f32 %v1208, 1.0
    %v1285 = vadd.f32 %v1209, 1.0
    %v1286 = vadd.f32 %v1210, 1.0
    %v1287 = vadd.f32 %v1211, 1.0
    %v1288 = vadd.f32 %v1212, 1.0
    %v1289 = vadd.f32 %v1213, 1.0
    %v1290 = vadd.f32 %v1214, 1.0
    %v1291 = vadd.f32 %v1215, 1.0
    %v1292 = vadd.f32 %v1216, 1.0
    %v1293 = vadd.f32 %v1217, 1.0
    %v1294 = vadd.f32 %v1218, 1.0
    %v1295 = vadd.f32 %v1219, 1.0
    %v1296 = vadd.f32 %v1220, 1.0
    %v1297 = vadd.f32 %v1221, 1.0
    %v1298 = vadd.f32 %v1222, 1.0
    %v1299 = vadd.f32 %v1223, 1.0
    %v1300 = vadd.f32 %v1224, 1.0
    %v1301 = vadd.f32 %v1225, 1.0
    %v1302 = vadd.f32 %v1226, 1.0
    %v1303 = vadd.f32 %v1227, 1.0
    %v1304 = vadd.f32 %v1228, 1.0
    %v1305 = vadd.f32 %v1229, 1.0
    %v1306 = vadd.f32 %v1230, 1.0
    %v1307 = vadd.f32 %v1231, 1.0
    %v1308 = vadd.f32 %v1232, 1.0
    %v1309 = vadd.f32 %v1233, 1.0
    %v1310 = vadd.f32 %v1234, 1.0
    %v1311 = vadd.f32 %v1235, 1.0
    %v1312 = vadd.f32 %v1236, 1.0
    %v1313 = vadd.f32 %v1237, 1.0
    %v1314 = vadd.f32 %v1238, 1.0
    %v1315 = vadd.f32 %v1239, 1.0
    %v1316 = vadd.f32 %v1240, 1.0
    %v1317 = vadd.f32 %v1241, 1.0
    %v1318 = vadd.f32 %v1242, 1.0
    %v1319 = vadd.f32 %v1243, 1.0
    %v1320 = vadd.f32 %v1244, 1.0
    %v1321 = vadd.f32 %v1245, 1.0
    %v1322 = vadd.f32 %v1246, 1.0
    %v1323 = vadd.f32 %v1247, 1.0
    %v1324 = vadd.f32 %v1248, 1.0
    %v1325 = vadd.f32 %v1249, 1.0
    %v1326 = vmul.f32 %v1022, %v1250
    %v1327 = vmul.f32 %v1023, %v1251
    %v1328 = vmul.f32 %v1024, %v1252
    %v1329 = vmul.f32 %v1025, %v1253
    %v1330 = vmul.f32 %v1026, %v1254
    %v1331 = vmul.f32 %v1027, %v1255
    %v1332 = vmul.f32 %v1028, %v1256
    %v1333 = vmul.f32 %v1029, %v1257
    %v1334 = vmul.f32 %v1030, %v1258
    %v1335 = vmul.f32 %v1031, %v1259
    %v1336 = vmul.f32 %v1032, %v1260
    %v1337 = vmul.f32 %v1033, %v1261
    %v1338 = vmul.f32 %v1034, %v1262
    %v1339 = vmul.f32 %v1035, %v1263
    %v1340 = vmul.f32 %v1036, %v1264
    %v1341 = vmul.f32 %v1037, %v1265
    %v1342 = vmul.f32 %v1038, %v1266
    %v1343 = vmul.f32 %v1039, %v1267
    %v1344 = vmul.f32 %v1040, %v1268
    %v1345 = vmul.f32 %v1041, %v1269
    %v1346 = vmul.f32 %v1042, %v1270
    %v1347 = vmul.f32 %v1043, %v1271
    %v1348 = vmul.f32 %v1044, %v1272
    %v1349 = vmul.f32 %v1045, %v1273
    %v1350 = vmul.f32 %v1046, %v1274
    %v1351 = vmul.f32 %v1047, %v1275
    %v1352 = vmul.f32 %v1048, %v1276
    %v1353 = vmul.f32 %v1049, %v1277
    %v1354 = vmul.f32 %v1050, %v1278
    %v1355 = vmul.f32 %v1051, %v1279
    %v1356 = vmul.f32 %v1052, %v1280
    %v1357 = vmul.f32 %v1053, %v1281
    %v1358 = vmul.f32 %v1054, %v1282
    %v1359 = vmul.f32 %v1055, %v1283
    %v1360 = vmul.f32 %v1056, %v1284
    %v1361 = vmul.f32 %v1057, %v1285
    %v1362 = vmul.f32 %v1058, %v1286
    %v1363 = vmul.f32 %v1059, %v1287
    %v1364 = vmul.f32 %v1060, %v1288
    %v1365 = vmul.f32 %v1061, %v1289
    %v1366 = vmul.f32 %v1062, %v1290
    %v1367 = vmul.f32 %v1063, %v1291
    %v1368 = vmul.f32 %v1064, %v1292
    %v1369 = vmul.f32 %v1065, %v1293
    %v1370 = vmul.f32 %v1066, %v1294
    %v1371 = vmul.f32 %v1067, %v1295
    %v1372 = vmul.f32 %v1068, %v1296
    %v1373 = vmul.f32 %v1069, %v1297
    %v1374 = vmul.f32 %v1070, %v1298
    %v1375 = vmul.f32 %v1071, %v1299
    %v1376 = vmul.f32 %v1072, %v1300
    %v1377 = vmul.f32 %v1073, %v1301
    %v1378 = vmul.f32 %v1074, %v1302
    %v1379 = vmul.f32 %v1075, %v1303
    %v1380 = vmul.f32 %v1076, %v1304
    %v1381 = vmul.f32 %v1077, %v1305
    %v1382 = vmul.f32 %v1078, %v1306
    %v1383 = vmul.f32 %v1079, %v1307
    %v1384 = vmul.f32 %v1080, %v1308
    %v1385 = vmul.f32 %v1081, %v1309
    %v1386 = vmul.f32 %v1082, %v1310
    %v1387 = vmul.f32 %v1083, %v1311
    %v1388 = vmul.f32 %v1084, %v1312
    %v1389 = vmul.f32 %v1085, %v1313
    %v1390 = vmul.f32 %v1086, %v1314
    %v1391 = vmul.f32 %v1087, %v1315
    %v1392 = vmul.f32 %v1088, %v1316
    %v1393 = vmul.f32 %v1089, %v1317
    %v1394 = vmul.f32 %v1090, %v1318
    %v1395 = vmul.f32 %v1091, %v1319
    %v1396 = vmul.f32 %v1092, %v1320
    %v1397 = vmul.f32 %v1093, %v1321
    %v1398 = vmul.f32 %v1094, %v1322
    %v1399 = vmul.f32 %v1095, %v1323
    %v1400 = vmul.f32 %v1096, %v1324
    %v1401 = vmul.f32 %v1097, %v1325
    %v1402 = vld [vmem:[#allocation2] sm:$0xff]
    %v1403 = vld [vmem:[#allocation2 + $0x8] sm:$0xff]
    %v1404 = vld [vmem:[#allocation2 + $0x10] sm:$0xff]
    %v1405 = vld [vmem:[#allocation2 + $0x18] sm:$0xff]
    %v1406 = vld [vmem:[#allocation2 + $0x20] sm:$0xff]
    %v1407 = vld [vmem:[#allocation2 + $0x28] sm:$0xff]
    %v1408 = vld [vmem:[#allocation2 + $0x30] sm:$0xff]
    %v1409 = vld [vmem:[#allocation2 + $0x38] sm:$0xff]
    %v1410 = vld [vmem:[#allocation2 + $0x40] sm:$0xff]
    %v1411 = vld [vmem:[#allocation2 + $0x48] sm:$0xff]
    %v1412 = vld [vmem:[#allocation2 + $0x50] sm:$0xff]
    %v1413 = vld [vmem:[#allocation2 + $0x58] sm:$0xff]
    %v1414 = vld [vmem:[#allocation2 + $0x60] sm:$0xff]
    %v1415 = vld [vmem:[#allocation2 + $0x68] sm:$0xff]
    %v1416 = vld [vmem:[#allocation2 + $0x70] sm:$0xff]
    %v1417 = vld [vmem:[#allocation2 + $0x78] sm:$0xff]
    %v1418 = vld [vmem:[#allocation2 + $0x80] sm:$0xff]
    %v1419 = vld [vmem:[#allocation2 + $0x88] sm:$0xff]
    %v1420 = vld [vmem:[#allocation2 + $0x90] sm:$0xff]
    %v1421 = vpack.c.bf16 %v1330, %v1326
    %v1422 = vpack.c.bf16 %v1331, %v1327
    %v1423 = vpack.c.bf16 %v1332, %v1328
    %v1424 = vpack.c.bf16 %v1333, %v1329
    %v1425 = vpack.c.bf16 %v1338, %v1334
    %v1426 = vpack.c.bf16 %v1339, %v1335
    %v1427 = vpack.c.bf16 %v1340, %v1336
    %v1428 = vpack.c.bf16 %v1341, %v1337
    %v1429 = vpack.c.bf16 %v1346, %v1342
    %v1430 = vpack.c.bf16 %v1347, %v1343
    %v1431 = vpack.c.bf16 %v1348, %v1344
    %v1432 = vpack.c.bf16 %v1349, %v1345
    %v1433 = vpack.c.bf16 %v1354, %v1350
    %v1434 = vpack.c.bf16 %v1355, %v1351
    %v1435 = vpack.c.bf16 %v1356, %v1352
    %v1436 = vpack.c.bf16 %v1357, %v1353
    %v1437 = vpack.c.bf16 %v1362, %v1358
    %v1438 = vpack.c.bf16 %v1363, %v1359
    %v1439 = vpack.c.bf16 %v1364, %v1360
    %v1440 = vpack.c.bf16 %v1365, %v1361
    %v1441 = vpack.c.bf16 %v1370, %v1366
    %v1442 = vpack.c.bf16 %v1371, %v1367
    %v1443 = vpack.c.bf16 %v1372, %v1368
    %v1444 = vpack.c.bf16 %v1373, %v1369
    %v1445 = vpack.c.bf16 %v1378, %v1374
    %v1446 = vpack.c.bf16 %v1379, %v1375
    %v1447 = vpack.c.bf16 %v1380, %v1376
    %v1448 = vpack.c.bf16 %v1381, %v1377
    %v1449 = vpack.c.bf16 %v1386, %v1382
    %v1450 = vpack.c.bf16 %v1387, %v1383
    %v1451 = vpack.c.bf16 %v1388, %v1384
    %v1452 = vpack.c.bf16 %v1389, %v1385
    %v1453 = vpack.c.bf16 %v1394, %v1390
    %v1454 = vpack.c.bf16 %v1395, %v1391
    %v1455 = vpack.c.bf16 %v1396, %v1392
    %v1456 = vpack.c.bf16 %v1397, %v1393
    %v1457 = vpack.c.bf16 %v1398, %v1398
    %v1458 = vpack.c.bf16 %v1399, %v1399
    %v1459 = vpack.c.bf16 %v1400, %v1400
    %v1460 = vpack.c.bf16 %v1401, %v1401
    %v1461 = vld [vmem:[#allocation9] sm:$0xf]
    %v1462 = vld [vmem:[#allocation9 + $0x4] sm:$0xf]
    %v1463 = vld [vmem:[#allocation9 + $0x8] sm:$0xf]
    %v1464 = vld [vmem:[#allocation9 + $0xc] sm:$0xf]
    %v1465 = vld [vmem:[#allocation9 + $0x10] sm:$0xf]
    %v1466 = vld [vmem:[#allocation9 + $0x14] sm:$0xf]
    %v1467 = vld [vmem:[#allocation9 + $0x18] sm:$0xf]
    %v1468 = vld [vmem:[#allocation9 + $0x1c] sm:$0xf]
    %v1469 = vld [vmem:[#allocation9 + $0x20] sm:$0xf]
    %v1470 = vld [vmem:[#allocation9 + $0x24] sm:$0xf]
    %v1471 = vld [vmem:[#allocation9 + $0x28] sm:$0xf]
    %v1472 = vld [vmem:[#allocation9 + $0x2c] sm:$0xf]
    %v1473 = vld [vmem:[#allocation9 + $0x30] sm:$0xf]
    %v1474 = vld [vmem:[#allocation9 + $0x34] sm:$0xf]
    %v1475 = vld [vmem:[#allocation9 + $0x38] sm:$0xf]
    %v1476 = vld [vmem:[#allocation9 + $0x3c] sm:$0xf]
    %v1477 = vld [vmem:[#allocation9 + $0x40] sm:$0xf]
    %v1478 = vld [vmem:[#allocation9 + $0x44] sm:$0xf]
    %v1479 = vld [vmem:[#allocation9 + $0x48] sm:$0xf]
    %v1480 = vld [vmem:[#allocation9 + $0x4c] sm:$0xf]
    %v1481 = vld [vmem:[#allocation9 + $0x50] sm:$0xf]
    %v1482 = vld [vmem:[#allocation9 + $0x54] sm:$0xf]
    %v1483 = vld [vmem:[#allocation9 + $0x58] sm:$0xf]
    %v1484 = vld [vmem:[#allocation9 + $0x5c] sm:$0xf]
    %v1485 = vld [vmem:[#allocation9 + $0x60] sm:$0xf]
    %v1486 = vld [vmem:[#allocation9 + $0x64] sm:$0xf]
    %v1487 = vld [vmem:[#allocation9 + $0x68] sm:$0xf]
    %v1488 = vld [vmem:[#allocation9 + $0x6c] sm:$0xf]
    %v1489 = vld [vmem:[#allocation9 + $0x70] sm:$0xf]
    %v1490 = vld [vmem:[#allocation9 + $0x74] sm:$0xf]
    %v1491 = vld [vmem:[#allocation9 + $0x78] sm:$0xf]
    %v1492 = vld [vmem:[#allocation9 + $0x7c] sm:$0xf]
    %v1493 = vld [vmem:[#allocation9 + $0x80] sm:$0xf]
    %v1494 = vld [vmem:[#allocation9 + $0x84] sm:$0xf]
    %v1495 = vld [vmem:[#allocation9 + $0x88] sm:$0xf]
    %v1496 = vld [vmem:[#allocation9 + $0x8c] sm:$0xf]
    %v1497 = vld [vmem:[#allocation9 + $0x90] sm:$0xf]
    %v1498 = vld [vmem:[#allocation9 + $0x94] sm:$0xf]
    %v1499 = vld [vmem:[#allocation9 + $0x98] sm:$0xf]
    %v1500 = vld [vmem:[#allocation9 + $0x9c] sm:$0xf]
    %v1501 = vld [vmem:[#allocation9 + $0xa0] sm:$0xf]
    %v1502 = vld [vmem:[#allocation9 + $0xa4] sm:$0xf]
    %v1503 = vld [vmem:[#allocation9 + $0xa8] sm:$0xf]
    %v1504 = vld [vmem:[#allocation9 + $0xac] sm:$0xf]
    %v1505 = vld [vmem:[#allocation9 + $0xb0] sm:$0xf]
    %v1506 = vld [vmem:[#allocation9 + $0xb4] sm:$0xf]
    %v1507 = vld [vmem:[#allocation9 + $0xb8] sm:$0xf]
    %v1508 = vld [vmem:[#allocation9 + $0xbc] sm:$0xf]
    %v1509 = vld [vmem:[#allocation9 + $0xc0] sm:$0xf]
    %v1510 = vld [vmem:[#allocation9 + $0xc4] sm:$0xf]
    %v1511 = vld [vmem:[#allocation9 + $0xc8] sm:$0xf]
    %v1512 = vld [vmem:[#allocation9 + $0xcc] sm:$0xf]
    %v1513 = vld [vmem:[#allocation9 + $0xd0] sm:$0xf]
    %v1514 = vld [vmem:[#allocation9 + $0xd4] sm:$0xf]
    %v1515 = vld [vmem:[#allocation9 + $0xd8] sm:$0xf]
    %v1516 = vld [vmem:[#allocation9 + $0xdc] sm:$0xf]
    %v1517 = vld [vmem:[#allocation9 + $0xe0] sm:$0xf]
    %v1518 = vld [vmem:[#allocation9 + $0xe4] sm:$0xf]
    %v1519 = vld [vmem:[#allocation9 + $0xe8] sm:$0xf]
    %v1520 = vld [vmem:[#allocation9 + $0xec] sm:$0xf]
    %v1521 = vld [vmem:[#allocation9 + $0xf0] sm:$0xf]
    %v1522 = vld [vmem:[#allocation9 + $0xf4] sm:$0xf]
    %v1523 = vld [vmem:[#allocation9 + $0xf8] sm:$0xf]
    %v1524 = vld [vmem:[#allocation9 + $0xfc] sm:$0xf]
    %v1589 = vunpack.c.l.b16 %v1461
    %v1590 = vunpack.c.l.b16 %v1462
    %v1591 = vunpack.c.l.b16 %v1463
    %v1592 = vunpack.c.l.b16 %v1464
    %v1593 = vunpack.c.l.b16 %v1465
    %v1594 = vunpack.c.l.b16 %v1466
    %v1595 = vunpack.c.l.b16 %v1467
    %v1596 = vunpack.c.l.b16 %v1468
    %v1597 = vunpack.c.l.b16 %v1469
    %v1598 = vunpack.c.l.b16 %v1470
    %v1599 = vunpack.c.l.b16 %v1471
    %v1600 = vunpack.c.l.b16 %v1472
    %v1601 = vunpack.c.l.b16 %v1473
    %v1602 = vunpack.c.l.b16 %v1474
    %v1603 = vunpack.c.l.b16 %v1475
    %v1604 = vunpack.c.l.b16 %v1476
    %v1605 = vunpack.c.l.b16 %v1477
    %v1606 = vunpack.c.l.b16 %v1478
    %v1607 = vunpack.c.l.b16 %v1479
    %v1608 = vunpack.c.l.b16 %v1480
    %v1609 = vunpack.c.l.b16 %v1481
    %v1610 = vunpack.c.l.b16 %v1482
    %v1611 = vunpack.c.l.b16 %v1483
    %v1612 = vunpack.c.l.b16 %v1484
    %v1613 = vunpack.c.l.b16 %v1485
    %v1614 = vunpack.c.l.b16 %v1486
    %v1615 = vunpack.c.l.b16 %v1487
    %v1616 = vunpack.c.l.b16 %v1488
    %v1617 = vunpack.c.l.b16 %v1489
    %v1618 = vunpack.c.l.b16 %v1490
    %v1619 = vunpack.c.l.b16 %v1491
    %v1620 = vunpack.c.l.b16 %v1492
    %v1621 = vunpack.c.l.b16 %v1493
    %v1622 = vunpack.c.l.b16 %v1494
    %v1623 = vunpack.c.l.b16 %v1495
    %v1624 = vunpack.c.l.b16 %v1496
    %v1625 = vunpack.c.l.b16 %v1497
    %v1626 = vunpack.c.l.b16 %v1498
    %v1627 = vunpack.c.l.b16 %v1499
    %v1628 = vunpack.c.l.b16 %v1500
    %v1629 = vunpack.c.l.b16 %v1501
    %v1630 = vunpack.c.l.b16 %v1502
    %v1631 = vunpack.c.l.b16 %v1503
    %v1632 = vunpack.c.l.b16 %v1504
    %v1633 = vunpack.c.l.b16 %v1505
    %v1634 = vunpack.c.l.b16 %v1506
    %v1635 = vunpack.c.l.b16 %v1507
    %v1636 = vunpack.c.l.b16 %v1508
    %v1637 = vunpack.c.l.b16 %v1509
    %v1638 = vunpack.c.l.b16 %v1510
    %v1639 = vunpack.c.l.b16 %v1511
    %v1640 = vunpack.c.l.b16 %v1512
    %v1641 = vunpack.c.l.b16 %v1513
    %v1642 = vunpack.c.l.b16 %v1514
    %v1643 = vunpack.c.l.b16 %v1515
    %v1644 = vunpack.c.l.b16 %v1516
    %v1645 = vunpack.c.l.b16 %v1517
    %v1646 = vunpack.c.l.b16 %v1518
    %v1647 = vunpack.c.l.b16 %v1519
    %v1648 = vunpack.c.l.b16 %v1520
    %v1649 = vunpack.c.l.b16 %v1521
    %v1650 = vunpack.c.l.b16 %v1522
    %v1651 = vunpack.c.l.b16 %v1523
    %v1652 = vunpack.c.l.b16 %v1524
    %v1653 = vpack.c.b16 %v1590, %v1589
    %v1654 = vpack.c.b16 %v1592, %v1591
    %v1655 = vpack.c.b16 %v1594, %v1593
    %v1656 = vpack.c.b16 %v1596, %v1595
    %v1657 = vpack.c.b16 %v1598, %v1597
    %v1658 = vpack.c.b16 %v1600, %v1599
    %v1659 = vpack.c.b16 %v1602, %v1601
    %v1660 = vpack.c.b16 %v1604, %v1603
    %v1661 = vpack.c.b16 %v1606, %v1605
    %v1662 = vpack.c.b16 %v1608, %v1607
    %v1663 = vpack.c.b16 %v1610, %v1609
    %v1664 = vpack.c.b16 %v1612, %v1611
    %v1665 = vpack.c.b16 %v1614, %v1613
    %v1666 = vpack.c.b16 %v1616, %v1615
    %v1667 = vpack.c.b16 %v1618, %v1617
    %v1668 = vpack.c.b16 %v1620, %v1619
    %v1669 = vpack.c.b16 %v1622, %v1621
    %v1670 = vpack.c.b16 %v1624, %v1623
    %v1671 = vpack.c.b16 %v1626, %v1625
    %v1672 = vpack.c.b16 %v1628, %v1627
    %v1673 = vpack.c.b16 %v1630, %v1629
    %v1674 = vpack.c.b16 %v1632, %v1631
    %v1675 = vpack.c.b16 %v1634, %v1633
    %v1676 = vpack.c.b16 %v1636, %v1635
    %v1677 = vpack.c.b16 %v1638, %v1637
    %v1678 = vpack.c.b16 %v1640, %v1639
    %v1679 = vpack.c.b16 %v1642, %v1641
    %v1680 = vpack.c.b16 %v1644, %v1643
    %v1681 = vpack.c.b16 %v1646, %v1645
    %v1682 = vpack.c.b16 %v1648, %v1647
    %v1683 = vpack.c.b16 %v1650, %v1649
    %v1684 = vpack.c.b16 %v1652, %v1651
    %1717 = vmatprep.subr.bf16.mxu0 0
    %1718 = vmatpush1.bf16.msra.mxu0 %v1660
    %1719 = vmatprep.subr.bf16.mxu0 0
    %1720 = vmatpush1.bf16.msra.mxu0 %v1659
    %1721 = vmatprep.subr.bf16.mxu0 0
    %1722 = vmatpush1.bf16.msra.mxu0 %v1658
    %1723 = vmatprep.subr.bf16.mxu0 0
    %1724 = vmatpush1.bf16.msra.mxu0 %v1657
    %1725 = vmatprep.subr.bf16.mxu0 0
    %1726 = vmatpush1.bf16.msra.mxu0 %v1656
    %1727 = vmatprep.subr.bf16.mxu0 0
    %1728 = vmatpush1.bf16.msra.mxu0 %v1655
    %1729 = vmatprep.subr.bf16.mxu0 0
    %1730 = vmatpush1.bf16.msra.mxu0 %v1654
    %1731 = vmatprep.subr.bf16.mxu0 0
    %1732 = vmatpush1.bf16.msra.mxu0 %v1653
    %1733 = vmatprep.subr.bf16.mxu0 0
    %1734 = vmatpush2.bf16.msra.mxu0 %v1668
    %1735 = vmatprep.subr.bf16.mxu0 0
    %1736 = vmatpush2.bf16.msra.mxu0 %v1667
    %1737 = vmatprep.subr.bf16.mxu0 0
    %1738 = vmatpush2.bf16.msra.mxu0 %v1666
    %1739 = vmatprep.subr.bf16.mxu0 0
    %1740 = vmatpush2.bf16.msra.mxu0 %v1665
    %1741 = vmatprep.subr.bf16.mxu0 0
    %1742 = vmatpush2.bf16.msra.mxu0 %v1664
    %1743 = vmatprep.subr.bf16.mxu0 0
    %1744 = vmatpush2.bf16.msra.mxu0 %v1663
    %1745 = vmatprep.subr.bf16.mxu0 0
    %1746 = vmatpush2.bf16.msra.mxu0 %v1662
    %1747 = vmatprep.subr.bf16.mxu0 0
    %1748 = vmatpush2.bf16.msra.mxu0 %v1661
    %1749 = vmatprep.mubr.bf16.mxu0 %v1422
    %1750 = vmatmul.mubr.bf16.gmra.mxu0 %v1421
    %v1751 = vpop.f32.mrf.mxu0
    %v1752 = vadd.f32 0.0, %v1751
    %v1753 = vpop.f32.mrf.mxu0
    %v1754 = vpop.f32.mrf.mxu0
    %v1755 = vadd.f32 0.0, %v1754
    %v1756 = vpop.f32.mrf.mxu0
    %1757 = vmatprep.mubr.bf16.mxu0 %v1426
    %1758 = vmatmul.mubr.bf16.gmra.mxu0 %v1425
    %v1759 = vpop.f32.mrf.mxu0
    %v1760 = vadd.f32 0.0, %v1759
    %v1761 = vpop.f32.mrf.mxu0
    %v1762 = vpop.f32.mrf.mxu0
    %v1763 = vadd.f32 0.0, %v1762
    %v1764 = vpop.f32.mrf.mxu0
    %1765 = vmatprep.mubr.bf16.mxu0 %v1430
    %1766 = vmatmul.mubr.bf16.gmra.mxu0 %v1429
    %v1767 = vpop.f32.mrf.mxu0
    %v1768 = vadd.f32 0.0, %v1767
    %v1769 = vpop.f32.mrf.mxu0
    %v1770 = vpop.f32.mrf.mxu0
    %v1771 = vadd.f32 0.0, %v1770
    %v1772 = vpop.f32.mrf.mxu0
    %1773 = vmatprep.mubr.bf16.mxu0 %v1434
    %1774 = vmatmul.mubr.bf16.gmra.mxu0 %v1433
    %v1775 = vpop.f32.mrf.mxu0
    %v1776 = vadd.f32 0.0, %v1775
    %v1777 = vpop.f32.mrf.mxu0
    %v1778 = vpop.f32.mrf.mxu0
    %v1779 = vadd.f32 0.0, %v1778
    %v1780 = vpop.f32.mrf.mxu0
    %1781 = vmatprep.mubr.bf16.mxu0 %v1438
    %1782 = vmatmul.mubr.bf16.gmra.mxu0 %v1437
    %v1783 = vpop.f32.mrf.mxu0
    %v1784 = vadd.f32 0.0, %v1783
    %v1785 = vpop.f32.mrf.mxu0
    %v1786 = vpop.f32.mrf.mxu0
    %v1787 = vadd.f32 0.0, %v1786
    %v1788 = vpop.f32.mrf.mxu0
    %1789 = vmatprep.mubr.bf16.mxu0 %v1442
    %1790 = vmatmul.mubr.bf16.gmra.mxu0 %v1441
    %v1791 = vpop.f32.mrf.mxu0
    %v1792 = vadd.f32 0.0, %v1791
    %v1793 = vpop.f32.mrf.mxu0
    %v1794 = vpop.f32.mrf.mxu0
    %v1795 = vadd.f32 0.0, %v1794
    %v1796 = vpop.f32.mrf.mxu0
    %1797 = vmatprep.mubr.bf16.mxu0 %v1446
    %1798 = vmatmul.mubr.bf16.gmra.mxu0 %v1445
    %v1799 = vpop.f32.mrf.mxu0
    %v1800 = vadd.f32 0.0, %v1799
    %v1801 = vpop.f32.mrf.mxu0
    %v1802 = vpop.f32.mrf.mxu0
    %v1803 = vadd.f32 0.0, %v1802
    %v1804 = vpop.f32.mrf.mxu0
    %1805 = vmatprep.mubr.bf16.mxu0 %v1450
    %1806 = vmatmul.mubr.bf16.gmra.mxu0 %v1449
    %v1807 = vpop.f32.mrf.mxu0
    %v1808 = vadd.f32 0.0, %v1807
    %v1809 = vpop.f32.mrf.mxu0
    %v1810 = vpop.f32.mrf.mxu0
    %v1811 = vadd.f32 0.0, %v1810
    %v1812 = vpop.f32.mrf.mxu0
    %1813 = vmatprep.mubr.bf16.mxu0 %v1454
    %1814 = vmatmul.mubr.bf16.gmra.mxu0 %v1453
    %v1815 = vpop.f32.mrf.mxu0
    %v1816 = vadd.f32 0.0, %v1815
    %v1817 = vpop.f32.mrf.mxu0
    %v1818 = vpop.f32.mrf.mxu0
    %v1819 = vadd.f32 0.0, %v1818
    %v1820 = vpop.f32.mrf.mxu0
    %1821 = vmatprep.mubr.bf16.mxu0 %v1458
    %1822 = vmatmul.mubr.bf16.gmra.mxu0 %v1457
    %v1823 = vpop.f32.mrf.mxu0
    %v1824 = vadd.f32 0.0, %v1823
    %v1825 = vpop.f32.mrf.mxu0
    %v1826 = vpop.f32.mrf.mxu0
    %v1827 = vpop.f32.mrf.mxu0
    %1828 = vdwg.mxu0
    %1829 = vmatprep.subr.bf16.mxu0 0
    %1830 = vmatpush1.bf16.msra.mxu0 %v1676
    %1831 = vmatprep.subr.bf16.mxu0 0
    %1832 = vmatpush1.bf16.msra.mxu0 %v1675
    %1833 = vmatprep.subr.bf16.mxu0 0
    %1834 = vmatpush1.bf16.msra.mxu0 %v1674
    %1835 = vmatprep.subr.bf16.mxu0 0
    %1836 = vmatpush1.bf16.msra.mxu0 %v1673
    %1837 = vmatprep.subr.bf16.mxu0 0
    %1838 = vmatpush1.bf16.msra.mxu0 %v1672
    %1839 = vmatprep.subr.bf16.mxu0 0
    %1840 = vmatpush1.bf16.msra.mxu0 %v1671
    %1841 = vmatprep.subr.bf16.mxu0 0
    %1842 = vmatpush1.bf16.msra.mxu0 %v1670
    %1843 = vmatprep.subr.bf16.mxu0 0
    %1844 = vmatpush1.bf16.msra.mxu0 %v1669
    %1845 = vmatprep.subr.bf16.mxu0 0
    %1846 = vmatpush2.bf16.msra.mxu0 %v1684
    %1847 = vmatprep.subr.bf16.mxu0 0
    %1848 = vmatpush2.bf16.msra.mxu0 %v1683
    %1849 = vmatprep.subr.bf16.mxu0 0
    %1850 = vmatpush2.bf16.msra.mxu0 %v1682
    %1851 = vmatprep.subr.bf16.mxu0 0
    %1852 = vmatpush2.bf16.msra.mxu0 %v1681
    %1853 = vmatprep.subr.bf16.mxu0 0
    %1854 = vmatpush2.bf16.msra.mxu0 %v1680
    %1855 = vmatprep.subr.bf16.mxu0 0
    %1856 = vmatpush2.bf16.msra.mxu0 %v1679
    %1857 = vmatprep.subr.bf16.mxu0 0
    %1858 = vmatpush2.bf16.msra.mxu0 %v1678
    %1859 = vmatprep.subr.bf16.mxu0 0
    %1860 = vmatpush2.bf16.msra.mxu0 %v1677
    %1861 = vmatprep.mubr.bf16.mxu0 %v1424
    %1862 = vmatmul.mubr.bf16.gmra.mxu0 %v1423
    %v1863 = vpop.f32.mrf.mxu0
    %v1864 = vadd.f32 %v1752, %v1863
    %v1865 = vpop.f32.mrf.mxu0
    %v1866 = vpop.f32.mrf.mxu0
    %v1867 = vadd.f32 %v1755, %v1866
    %v1868 = vpop.f32.mrf.mxu0
    %1869 = vmatprep.mubr.bf16.mxu0 %v1428
    %1870 = vmatmul.mubr.bf16.gmra.mxu0 %v1427
    %v1871 = vpop.f32.mrf.mxu0
    %v1872 = vadd.f32 %v1760, %v1871
    %v1873 = vpop.f32.mrf.mxu0
    %v1874 = vpop.f32.mrf.mxu0
    %v1875 = vadd.f32 %v1763, %v1874
    %v1876 = vpop.f32.mrf.mxu0
    %1877 = vmatprep.mubr.bf16.mxu0 %v1432
    %1878 = vmatmul.mubr.bf16.gmra.mxu0 %v1431
    %v1879 = vpop.f32.mrf.mxu0
    %v1880 = vadd.f32 %v1768, %v1879
    %v1881 = vpop.f32.mrf.mxu0
    %v1882 = vpop.f32.mrf.mxu0
    %v1883 = vadd.f32 %v1771, %v1882
    %v1884 = vpop.f32.mrf.mxu0
    %1885 = vmatprep.mubr.bf16.mxu0 %v1436
    %1886 = vmatmul.mubr.bf16.gmra.mxu0 %v1435
    %v1887 = vpop.f32.mrf.mxu0
    %v1888 = vadd.f32 %v1776, %v1887
    %v1889 = vpop.f32.mrf.mxu0
    %v1890 = vpop.f32.mrf.mxu0
    %v1891 = vadd.f32 %v1779, %v1890
    %v1892 = vpop.f32.mrf.mxu0
    %1893 = vmatprep.mubr.bf16.mxu0 %v1440
    %1894 = vmatmul.mubr.bf16.gmra.mxu0 %v1439
    %v1895 = vpop.f32.mrf.mxu0
    %v1896 = vadd.f32 %v1784, %v1895
    %v1897 = vpop.f32.mrf.mxu0
    %v1898 = vpop.f32.mrf.mxu0
    %v1899 = vadd.f32 %v1787, %v1898
    %v1900 = vpop.f32.mrf.mxu0
    %1901 = vmatprep.mubr.bf16.mxu0 %v1444
    %1902 = vmatmul.mubr.bf16.gmra.mxu0 %v1443
    %v1903 = vpop.f32.mrf.mxu0
    %v1904 = vadd.f32 %v1792, %v1903
    %v1905 = vpop.f32.mrf.mxu0
    %v1906 = vpop.f32.mrf.mxu0
    %v1907 = vadd.f32 %v1795, %v1906
    %v1908 = vpop.f32.mrf.mxu0
    %1909 = vmatprep.mubr.bf16.mxu0 %v1448
    %1910 = vmatmul.mubr.bf16.gmra.mxu0 %v1447
    %v1911 = vpop.f32.mrf.mxu0
    %v1912 = vadd.f32 %v1800, %v1911
    %v1913 = vpop.f32.mrf.mxu0
    %v1914 = vpop.f32.mrf.mxu0
    %v1915 = vadd.f32 %v1803, %v1914
    %v1916 = vpop.f32.mrf.mxu0
    %1917 = vmatprep.mubr.bf16.mxu0 %v1452
    %1918 = vmatmul.mubr.bf16.gmra.mxu0 %v1451
    %v1919 = vpop.f32.mrf.mxu0
    %v1920 = vadd.f32 %v1808, %v1919
    %v1921 = vpop.f32.mrf.mxu0
    %v1922 = vpop.f32.mrf.mxu0
    %v1923 = vadd.f32 %v1811, %v1922
    %v1924 = vpop.f32.mrf.mxu0
    %1925 = vmatprep.mubr.bf16.mxu0 %v1456
    %1926 = vmatmul.mubr.bf16.gmra.mxu0 %v1455
    %v1927 = vpop.f32.mrf.mxu0
    %v1928 = vadd.f32 %v1816, %v1927
    %v1929 = vpop.f32.mrf.mxu0
    %v1930 = vpop.f32.mrf.mxu0
    %v1931 = vadd.f32 %v1819, %v1930
    %v1932 = vpop.f32.mrf.mxu0
    %1933 = vmatprep.mubr.bf16.mxu0 %v1460
    %1934 = vmatmul.mubr.bf16.gmra.mxu0 %v1459
    %v1935 = vpop.f32.mrf.mxu0
    %v1936 = vadd.f32 %v1824, %v1935
    %v1937 = vpop.f32.mrf.mxu0
    %v1938 = vpop.f32.mrf.mxu0
    %v1939 = vpop.f32.mrf.mxu0
    %1940 = vdwg.mxu0
    %v1941 = vadd.f32 %v1402, %v1864
    %v1942 = vadd.f32 %v1403, %v1867
    %v1943 = vadd.f32 %v1404, %v1872
    %v1944 = vadd.f32 %v1405, %v1875
    %v1945 = vadd.f32 %v1406, %v1880
    %v1946 = vadd.f32 %v1407, %v1883
    %v1947 = vadd.f32 %v1408, %v1888
    %v1948 = vadd.f32 %v1409, %v1891
    %v1949 = vadd.f32 %v1410, %v1896
    %v1950 = vadd.f32 %v1411, %v1899
    %v1951 = vadd.f32 %v1412, %v1904
    %v1952 = vadd.f32 %v1413, %v1907
    %v1953 = vadd.f32 %v1414, %v1912
    %v1954 = vadd.f32 %v1415, %v1915
    %v1955 = vadd.f32 %v1416, %v1920
    %v1956 = vadd.f32 %v1417, %v1923
    %v1957 = vadd.f32 %v1418, %v1928
    %v1958 = vadd.f32 %v1419, %v1931
    %v1959 = vadd.f32 %v1420, %v1936
    %1960 = vst [vmem:[#allocation2] sm:$0xff] %v1941
    %1961 = vst [vmem:[#allocation2 + $0x8] sm:$0xff] %v1942
    %1962 = vst [vmem:[#allocation2 + $0x10] sm:$0xff] %v1943
    %1963 = vst [vmem:[#allocation2 + $0x18] sm:$0xff] %v1944
    %1964 = vst [vmem:[#allocation2 + $0x20] sm:$0xff] %v1945
    %1965 = vst [vmem:[#allocation2 + $0x28] sm:$0xff] %v1946
    %1966 = vst [vmem:[#allocation2 + $0x30] sm:$0xff] %v1947
    %1967 = vst [vmem:[#allocation2 + $0x38] sm:$0xff] %v1948
    %1968 = vst [vmem:[#allocation2 + $0x40] sm:$0xff] %v1949
    %1969 = vst [vmem:[#allocation2 + $0x48] sm:$0xff] %v1950
    %1970 = vst [vmem:[#allocation2 + $0x50] sm:$0xff] %v1951
    %1971 = vst [vmem:[#allocation2 + $0x58] sm:$0xff] %v1952
    %1972 = vst [vmem:[#allocation2 + $0x60] sm:$0xff] %v1953
    %1973 = vst [vmem:[#allocation2 + $0x68] sm:$0xff] %v1954
    %1974 = vst [vmem:[#allocation2 + $0x70] sm:$0xff] %v1955
    %1975 = vst [vmem:[#allocation2 + $0x78] sm:$0xff] %v1956
    %1976 = vst [vmem:[#allocation2 + $0x80] sm:$0xff] %v1957
    %1977 = vst [vmem:[#allocation2 + $0x88] sm:$0xff] %v1958
    %1978 = vst [vmem:[#allocation2 + $0x90] sm:$0xff] %v1959
    // Predicated region
    $region46: #{tpu_custom_call.1} parent=1 // pred_check
      %p1979 = pneg %p69
    $region47: #{tpu_custom_call.1} parent=1 // pred_check_branch
      %1981 = sbr.rel (%p1979) target = $region49
    $region48: #{tpu_custom_call.1} parent=1 // pred_region
      %v1982 = vld [vmem:[#allocation2] sm:$0xff]
      %v1983 = vld [vmem:[#allocation2 + $0x8] sm:$0xff]
      %v1984 = vld [vmem:[#allocation2 + $0x10] sm:$0xff]
      %v1985 = vld [vmem:[#allocation2 + $0x18] sm:$0xff]
      %v1986 = vld [vmem:[#allocation2 + $0x20] sm:$0xff]
      %v1987 = vld [vmem:[#allocation2 + $0x28] sm:$0xff]
      %v1988 = vld [vmem:[#allocation2 + $0x30] sm:$0xff]
      %v1989 = vld [vmem:[#allocation2 + $0x38] sm:$0xff]
      %v1990 = vld [vmem:[#allocation2 + $0x40] sm:$0xff]
      %v1991 = vld [vmem:[#allocation2 + $0x48] sm:$0xff]
      %v1992 = vld [vmem:[#allocation2 + $0x50] sm:$0xff]
      %v1993 = vld [vmem:[#allocation2 + $0x58] sm:$0xff]
      %v1994 = vld [vmem:[#allocation2 + $0x60] sm:$0xff]
      %v1995 = vld [vmem:[#allocation2 + $0x68] sm:$0xff]
      %v1996 = vld [vmem:[#allocation2 + $0x70] sm:$0xff]
      %v1997 = vld [vmem:[#allocation2 + $0x78] sm:$0xff]
      %v1998 = vld [vmem:[#allocation2 + $0x80] sm:$0xff]
      %v1999 = vld [vmem:[#allocation2 + $0x88] sm:$0xff]
      %v2000 = vld [vmem:[#allocation2 + $0x90] sm:$0xff]
      %v2001 = vld [vmem:[%s6] sm:$0x1]
      %v2003 = vlaneseq
      %v2004 = vshrl.u32 %v2003, 7
      %v2005 = vsub.s32 0, %v2004
      %v2006 = vrot.slane %v2001, %v2005
      %v2008 = vadd.f32 %v1982, %v2006
      %v2009 = vadd.f32 %v1983, %v2006
      %v2010 = vadd.f32 %v1984, %v2006
      %v2011 = vadd.f32 %v1985, %v2006
      %v2012 = vadd.f32 %v1986, %v2006
      %v2013 = vadd.f32 %v1987, %v2006
      %v2014 = vadd.f32 %v1988, %v2006
      %v2015 = vadd.f32 %v1989, %v2006
      %v2016 = vadd.f32 %v1990, %v2006
      %v2017 = vadd.f32 %v1991, %v2006
      %v2018 = vadd.f32 %v1992, %v2006
      %v2019 = vadd.f32 %v1993, %v2006
      %v2020 = vadd.f32 %v1994, %v2006
      %v2021 = vadd.f32 %v1995, %v2006
      %v2022 = vadd.f32 %v1996, %v2006
      %v2023 = vadd.f32 %v1997, %v2006
      %v2024 = vadd.f32 %v1998, %v2006
      %v2025 = vadd.f32 %v1999, %v2006
      %v2026 = vadd.f32 %v2000, %v2006
      %v2027 = vld [vmem:[#allocation4] sm:$0xff]
      %v2028 = vld [vmem:[#allocation4 + $0x8] sm:$0xff]
      %v2029 = vld [vmem:[#allocation4 + $0x10] sm:$0xff]
      %v2030 = vld [vmem:[#allocation4 + $0x18] sm:$0xff]
      %v2031 = vld [vmem:[#allocation4 + $0x20] sm:$0xff]
      %v2032 = vld [vmem:[#allocation4 + $0x28] sm:$0xff]
      %v2033 = vld [vmem:[#allocation4 + $0x30] sm:$0xff]
      %v2034 = vld [vmem:[#allocation4 + $0x38] sm:$0xff]
      %v2035 = vld [vmem:[#allocation4 + $0x40] sm:$0xff]
      %v2036 = vld [vmem:[#allocation4 + $0x48] sm:$0xff]
      %v2037 = vld [vmem:[#allocation4 + $0x50] sm:$0xff]
      %v2038 = vld [vmem:[#allocation4 + $0x58] sm:$0xff]
      %v2039 = vld [vmem:[#allocation4 + $0x60] sm:$0xff]
      %v2040 = vld [vmem:[#allocation4 + $0x68] sm:$0xff]
      %v2041 = vld [vmem:[#allocation4 + $0x70] sm:$0xff]
      %v2042 = vld [vmem:[#allocation4 + $0x78] sm:$0xff]
      %v2043 = vld [vmem:[#allocation4 + $0x80] sm:$0xff]
      %v2044 = vld [vmem:[#allocation4 + $0x88] sm:$0xff]
      %v2045 = vld [vmem:[#allocation4 + $0x90] sm:$0xff]
      %v2046 = vadd.f32 %v2008, %v2027
      %v2047 = vadd.f32 %v2009, %v2028
      %v2048 = vadd.f32 %v2010, %v2029
      %v2049 = vadd.f32 %v2011, %v2030
      %v2050 = vadd.f32 %v2012, %v2031
      %v2051 = vadd.f32 %v2013, %v2032
      %v2052 = vadd.f32 %v2014, %v2033
      %v2053 = vadd.f32 %v2015, %v2034
      %v2054 = vadd.f32 %v2016, %v2035
      %v2055 = vadd.f32 %v2017, %v2036
      %v2056 = vadd.f32 %v2018, %v2037
      %v2057 = vadd.f32 %v2019, %v2038
      %v2058 = vadd.f32 %v2020, %v2039
      %v2059 = vadd.f32 %v2021, %v2040
      %v2060 = vadd.f32 %v2022, %v2041
      %v2061 = vadd.f32 %v2023, %v2042
      %v2062 = vadd.f32 %v2024, %v2043
      %v2063 = vadd.f32 %v2025, %v2044
      %v2064 = vadd.f32 %v2026, %v2045
      %2065 = vst [vmem:[#allocation10] sm:$0xff] %v2046
      %2066 = vst [vmem:[#allocation10 + $0x8] sm:$0xff] %v2047
      %2067 = vst [vmem:[#allocation10 + $0x10] sm:$0xff] %v2048
      %2068 = vst [vmem:[#allocation10 + $0x18] sm:$0xff] %v2049
      %2069 = vst [vmem:[#allocation10 + $0x20] sm:$0xff] %v2050
      %2070 = vst [vmem:[#allocation10 + $0x28] sm:$0xff] %v2051
      %2071 = vst [vmem:[#allocation10 + $0x30] sm:$0xff] %v2052
      %2072 = vst [vmem:[#allocation10 + $0x38] sm:$0xff] %v2053
      %2073 = vst [vmem:[#allocation10 + $0x40] sm:$0xff] %v2054
      %2074 = vst [vmem:[#allocation10 + $0x48] sm:$0xff] %v2055
      %2075 = vst [vmem:[#allocation10 + $0x50] sm:$0xff] %v2056
      %2076 = vst [vmem:[#allocation10 + $0x58] sm:$0xff] %v2057
      %2077 = vst [vmem:[#allocation10 + $0x60] sm:$0xff] %v2058
      %2078 = vst [vmem:[#allocation10 + $0x68] sm:$0xff] %v2059
      %2079 = vst [vmem:[#allocation10 + $0x70] sm:$0xff] %v2060
      %2080 = vst [vmem:[#allocation10 + $0x78] sm:$0xff] %v2061
      %2081 = vst [vmem:[#allocation10 + $0x80] sm:$0xff] %v2062
      %2082 = vst [vmem:[#allocation10 + $0x88] sm:$0xff] %v2063
      %2083 = vst [vmem:[#allocation10 + $0x90] sm:$0xff] %v2064
    $region49: #{tpu_custom_call.1} parent=1 // pred_fallthru
      _
    // Predicated region
    $region50: #{tpu_custom_call.1} parent=1 // pred_check
      _
    $region51: #{tpu_custom_call.1} parent=1 // pred_check_branch
      %2085 = sbr.rel (0) target = $region53
    $region52: #{tpu_custom_call.1} parent=1 // pred_region
      %s2087 = ssub.s32 2432, 2432
      %2088 = vsyncadd [#allocation6], %s2087
      %s2089 = sshll.u32 [#allocation10], 4
      %s2090 = int_to_ptr.vmem [resolvable:$true] %s2089
      %2095 = dma.vmem_to_hbm [thread:$0]  %s2090, 2432, %s7, [#allocation6], 128, 128, 8
    $region53: #{tpu_custom_call.1} parent=1 // pred_fallthru
      _
    // Predicated region
    $region54: #{tpu_custom_call.1} parent=1 // pred_check
      _
    $region55: #{tpu_custom_call.1} parent=1 // pred_check_branch
      %2097 = sbr.rel (0) target = $region57
    $region56: #{tpu_custom_call.1} parent=1 // pred_region
      %2098 = dma.done [#allocation6], 2432
    $region57: #{tpu_custom_call.1} parent=1 // pred_fallthru
      _
    %2099 = vsyncpa [#allocation5], 1
    %2100 = vsyncpa [#allocation8], 1
    %2101 = vsyncpa [#allocation6], 1

</llo_original>
